<compile_context>
chip_gen: v6e
topology: v6e:2x2x1
jax: 0.10.0
libtpu: 0.0.40
codegen_flags: <defaults>
</compile_context>

<pallas_src>
import functools

import jax
import jax.numpy as jnp
from jax import lax
from jax.experimental import pallas as pl
from jax.experimental.pallas import tpu as pltpu


def _round_up(x, m):
    return ((x + m - 1) // m) * m


def _pad_to(a, shape):
    return jnp.pad(a, [(0, t - s) for s, t in zip(a.shape, shape)])


def mlp_softmax_kernel(*refs, n_layer, n_valid_out, compute_dtype,
                       exact_softmax):
    if n_layer > 0:
        x_ref, w1_ref, b1_ref, wh_ref, bh_ref, wo_ref, bo_ref, o_ref = refs
    else:
        x_ref, w1_ref, b1_ref, wo_ref, bo_ref, o_ref = refs
        wh_ref = bh_ref = None
    cd = compute_dtype

    # fc1 + ReLU (MXU dot in compute_dtype, f32 accumulation, f32 elementwise)
    h = jnp.dot(x_ref[...], w1_ref[...],
                preferred_element_type=jnp.float32) + b1_ref[...]
    h = jnp.maximum(h, 0.0)

    # hidden Linear + ReLU stack (fori_loop bounds live ranges; unroll capped)
    if n_layer > 0:
        def layer_body(i, h):
            a = jnp.dot(h.astype(cd), wh_ref[i],
                        preferred_element_type=jnp.float32) + bh_ref[i]
            return jnp.maximum(a, 0.0)

        unroll = n_layer if n_layer <= 8 else 4
        h = lax.fori_loop(0, n_layer, layer_body, h, unroll=unroll)

    # output Linear
    logits = jnp.dot(h.astype(cd), wo_ref[...],
                     preferred_element_type=jnp.float32) + bo_ref[...]

    # mask the zero-padded logit columns so they don't leak into the softmax
    col = lax.broadcasted_iota(jnp.int32, logits.shape, 1)
    logits = jnp.where(col < n_valid_out, logits, jnp.finfo(logits.dtype).min)

    # numerically stable softmax over dim=1
    m = jnp.max(logits, axis=1, keepdims=True)
    e = jnp.exp(logits - m)
    denom = jnp.sum(e, axis=1, keepdims=True)
    if exact_softmax:
        probs = e / denom                                  # bit-close f32 path
    else:
        probs = e * pl.reciprocal(denom, approx=True)      # EUP, free slot
    o_ref[...] = probs.astype(o_ref.dtype)


def prepare_params(params, n_layer, *, compute_dtype=jnp.bfloat16):
    """Pad + cast parameters once (hoisted out of the per-forward hot path)."""
    w1, b1, wh, bh, wo, bo = params
    n_in, n_nodes = w1.shape
    n_out = wo.shape[1]

    nin_p = _round_up(n_in, 128)
    # v6e/v7x MXUs are 256 wide: once the hidden dim exceeds one 128-lane tile,
    # pad it to a 256 multiple so each pass fills the array.
    nn_p = _round_up(n_nodes, 256) if n_nodes > 128 else 128
    nout_p = _round_up(n_out, 128)

    prepared = {
        "n_layer": int(n_layer),
        "n_in": int(n_in), "n_out": int(n_out),
        "nin_p": nin_p, "nn_p": nn_p, "nout_p": nout_p,
        "compute_dtype": compute_dtype,
        # weights in compute_dtype (bf16 feeds the MXU at full rate, halves
        # bytes); biases stay f32 for the VPU-side adds.
        "w1": _pad_to(w1, (nin_p, nn_p)).astype(compute_dtype),
        "b1": _pad_to(b1.reshape(1, -1), (1, nn_p)).astype(jnp.float32),
        "wo": _pad_to(wo, (nn_p, nout_p)).astype(compute_dtype),
        "bo": _pad_to(bo.reshape(1, -1), (1, nout_p)).astype(jnp.float32),
    }
    if n_layer > 0:
        prepared["wh"] = _pad_to(wh, (n_layer, nn_p, nn_p)).astype(compute_dtype)
        prepared["bh"] = _pad_to(bh, (n_layer, 1, nn_p)).astype(jnp.float32)
    return prepared


def _vmem_ceiling_bytes():
    # ~48 MiB on 128 MiB parts (v5e/v6e), ~38 MiB on the 64 MiB v7x.
    try:
        cap = int(pltpu.get_tpu_info().vmem_capacity_bytes)
    except Exception:
        cap = 64 * 1024 * 1024
    return min(48 * 1024 * 1024, int(cap * 0.6))


def torch_model_forward(x, prepared, *, block_batch=256):
    """Pallas implementation of TorchModel.forward on pre-padded params."""
    n_layer = prepared["n_layer"]
    cd = prepared["compute_dtype"]
    nin_p, nout_p = prepared["nin_p"], prepared["nout_p"]
    n_out = prepared["n_out"]
    batch = x.shape[0]

    # Batch tile: as large as block_batch allows (fewer, fatter grid steps),
    # sublane-packed for cd (16 rows for bf16), and split into >= 2 grid steps
    # when the batch allows so ("parallel",) can use both v7x TensorCores.
    sub = 16 if jnp.dtype(cd).itemsize == 2 else 8
    bb = max(_round_up(block_batch, sub), sub)
    batch_r = _round_up(batch, sub)
    if batch_r <= bb:
        tb = _round_up(pl.cdiv(batch_r, 2), sub) if batch_r >= 2 * sub else batch_r
    else:
        tb = bb
    batch_p = tb * pl.cdiv(batch, tb)
    grid = (batch_p // tb,)

    # x cast to the MXU compute dtype in the wrapper (halves its DMA bytes).
    x_p = _pad_to(x.astype(cd), (batch_p, nin_p))

    resident_arrays = [prepared["w1"], prepared["b1"]]
    if n_layer > 0:
        resident_arrays += [prepared["wh"], prepared["bh"]]
    resident_arrays += [prepared["wo"], prepared["bo"]]
    operands = [x_p] + resident_arrays

    resident_bytes = sum(int(a.size) * a.dtype.itemsize for a in resident_arrays)
    stream_bytes = 2 * tb * (nin_p * x_p.dtype.itemsize + nout_p * 4)
    vmem_limit = int(min(_vmem_ceiling_bytes(),
                         max(32 * 1024 * 1024,
                             2 * resident_bytes + stream_bytes + (8 << 20))))

    kernel_fn = functools.partial(
        mlp_softmax_kernel, n_layer=n_layer, n_valid_out=n_out,
        compute_dtype=cd, exact_softmax=(jnp.dtype(cd) == jnp.float32))

    def build(single_buffer_residents):
        def resident(a):
            ndim = a.ndim
            idx = lambda i: (0,) * ndim   # same block every step -> DMA'd once
            if single_buffer_residents:
                # constant index_map: single-buffer to halve the weight-stack
                # VMEM footprint (matters on v7x's 64 MiB VMEM).
                return pl.BlockSpec(a.shape, idx, pipeline_mode=pl.Buffered(1))
            return pl.BlockSpec(a.shape, idx)

        in_specs = [pl.BlockSpec((tb, nin_p), lambda i: (i, 0))]
        in_specs += [resident(a) for a in resident_arrays]

        return pl.pallas_call(
            kernel_fn,
            out_shape=jax.ShapeDtypeStruct((batch_p, nout_p), jnp.float32),
            grid=grid,
            in_specs=in_specs,
            out_specs=pl.BlockSpec((tb, nout_p), lambda i: (i, 0)),
            compiler_params=pltpu.CompilerParams(
                dimension_semantics=("parallel",),
                vmem_limit_bytes=vmem_limit),
        )

    try:
        out_p = build(True)(*operands)
    except Exception:
        # Fallback for jax versions without pipeline_mode=pl.Buffered(1)
        # support on pallas_call input BlockSpecs (default double buffering).
        out_p = build(False)(*operands)

    return out_p[:batch, :n_out]


def init_params(key, n_inputs, n_outputs, n_layer, n_nodes):
    """Deterministic parameter init (PyTorch-style uniform fan-in bound)."""
    ks = jax.random.split(key, 6)

    def uni(k, shape, fan_in):
        bound = 1.0 / jnp.sqrt(fan_in)
        return jax.random.uniform(k, shape, jnp.float32, -bound, bound)

    w1 = uni(ks[0], (n_inputs, n_nodes), n_inputs)
    b1 = uni(ks[1], (1, n_nodes), n_inputs)
    wh = uni(ks[2], (max(n_layer, 1), n_nodes, n_nodes), n_nodes)
    bh = uni(ks[3], (max(n_layer, 1), 1, n_nodes), n_nodes)
    wo = uni(ks[4], (n_nodes, n_outputs), n_nodes)
    bo = uni(ks[5], (1, n_outputs), n_nodes)
    return w1, b1, wh, bh, wo, bo


def reference_forward(x, params, n_layer):
    w1, b1, wh, bh, wo, bo = params
    h = jnp.maximum(x @ w1 + b1, 0.0)
    for i in range(n_layer):
        h = jnp.maximum(h @ wh[i] + bh[i], 0.0)
    logits = h @ wo + bo
    return jax.nn.softmax(logits, axis=1)


if __name__ == "__main__":
    # Small shapes consistent with the RL-policy usage of TorchModel; batch is
    # large enough to exercise the batch grid (tb=128 -> grid=(2,)).
    BATCH = 256
    N_INPUTS = 4
    N_OUTPUTS = 2
    N_LAYER = 2
    N_NODES = 32

    key = jax.random.PRNGKey(0)
    kx, kp = jax.random.split(key)
    x = jax.random.normal(kx, (BATCH, N_INPUTS), dtype=jnp.float32)
    params = init_params(kp, N_INPUTS, N_OUTPUTS, N_LAYER, N_NODES)

    ref = reference_forward(x, params, N_LAYER)

    # f32 compute path: matches PyTorch f32 semantics (exact softmax divide).
    prep_f32 = prepare_params(params, N_LAYER, compute_dtype=jnp.float32)
    out_f32 = jax.block_until_ready(torch_model_forward(x, prep_f32))
    assert out_f32.shape == (BATCH, N_OUTPUTS)
    assert jnp.allclose(out_f32, ref, atol=1e-3, rtol=1e-3)
    assert jnp.allclose(jnp.sum(out_f32, axis=1), 1.0, atol=1e-4)

    # bf16-weight fast path (default): MXU-rate weights, f32 accumulation.
    prep_bf16 = prepare_params(params, N_LAYER, compute_dtype=jnp.bfloat16)
    out_bf16 = jax.block_until_ready(torch_model_forward(x, prep_bf16))
    assert out_bf16.shape == (BATCH, N_OUTPUTS)
    assert jnp.allclose(out_bf16, ref, atol=2e-2, rtol=2e-2)
    assert jnp.allclose(jnp.sum(out_bf16, axis=1), 1.0, atol=5e-3)

    # n_layer == 0 configuration: no dummy hidden-weight operands are shipped.
    params0 = init_params(kp, N_INPUTS, N_OUTPUTS, 0, N_NODES)
    prep0 = prepare_params(params0, 0, compute_dtype=jnp.float32)
    out0 = jax.block_until_ready(torch_model_forward(x, prep0))
    ref0 = reference_forward(x, params0, 0)
    assert jnp.allclose(out0, ref0, atol=1e-3, rtol=1e-3)

    print("KERNEL_OK")
</pallas_src>

<mosaic_0001>
module attributes {stable_mosaic.version = 11 : i64} {
  func.func @mlp_softmax_kernel(%arg0: i32, %arg1: memref<128x128xf32, #tpu.memory_space<vmem>>, %arg2: memref<128x128xf32, #tpu.memory_space<vmem>>, %arg3: memref<1x128xf32, #tpu.memory_space<vmem>>, %arg4: memref<2x128x128xf32, #tpu.memory_space<vmem>>, %arg5: memref<2x1x128xf32, #tpu.memory_space<vmem>>, %arg6: memref<128x128xf32, #tpu.memory_space<vmem>>, %arg7: memref<1x128xf32, #tpu.memory_space<vmem>>, %arg8: memref<128x128xf32, #tpu.memory_space<vmem>>) attributes {dimension_semantics = [#tpu.dimension_semantics<parallel>], iteration_bounds = array<i64: 2>, scalar_prefetch = 0 : i64, scratch_operands = 0 : i64, tpu.core_type = #tpu.core_type<tc>, window_params = [{transform_indices = @transform_0, window_bounds = array<i64: 128, 128>}, {pipeline_mode = #tpu.pipeline_mode<synchronous>, transform_indices = @transform_1, window_bounds = array<i64: 128, 128>}, {pipeline_mode = #tpu.pipeline_mode<synchronous>, transform_indices = @transform_2, window_bounds = array<i64: 1, 128>}, {pipeline_mode = #tpu.pipeline_mode<synchronous>, transform_indices = @transform_3, window_bounds = array<i64: 2, 128, 128>}, {pipeline_mode = #tpu.pipeline_mode<synchronous>, transform_indices = @transform_4, window_bounds = array<i64: 2, 1, 128>}, {pipeline_mode = #tpu.pipeline_mode<synchronous>, transform_indices = @transform_5, window_bounds = array<i64: 128, 128>}, {pipeline_mode = #tpu.pipeline_mode<synchronous>, transform_indices = @transform_6, window_bounds = array<i64: 1, 128>}, {transform_indices = @transform_7, window_bounds = array<i64: 128, 128>}]} {
    %c0 = arith.constant 0 : index
    %c0_0 = arith.constant 0 : index
    %0 = vector.load %arg1[%c0, %c0_0] : memref<128x128xf32, #tpu.memory_space<vmem>>, vector<128x128xf32>
    %c0_1 = arith.constant 0 : index
    %c0_2 = arith.constant 0 : index
    %1 = vector.load %arg2[%c0_1, %c0_2] : memref<128x128xf32, #tpu.memory_space<vmem>>, vector<128x128xf32>
    %cst = arith.constant dense<0.000000e+00> : vector<128x128xf32>
    %2 = tpu.matmul %0, %1, %cst {dimension_numbers = #tpu.dot_dimension_numbers<[1], [0], [0], [1], [0, 0, 1, 1], [], []>} : vector<128x128xf32>, vector<128x128xf32>, vector<128x128xf32> -> vector<128x128xf32>
    %c0_3 = arith.constant 0 : index
    %c0_4 = arith.constant 0 : index
    %3 = vector.load %arg3[%c0_3, %c0_4] : memref<1x128xf32, #tpu.memory_space<vmem>>, vector<1x128xf32>
    %4 = vector.broadcast %3 : vector<1x128xf32> to vector<128x128xf32>
    %5 = arith.addf %2, %4 : vector<128x128xf32>
    %cst_5 = arith.constant 0.000000e+00 : f32
    %6 = vector.broadcast %cst_5 : f32 to vector<128x128xf32>
    %7 = arith.maximumf %5, %6 : vector<128x128xf32>
    %c0_i32 = arith.constant 0 : i32
    %8 = arith.index_cast %c0_i32 : i32 to index
    %c0_6 = arith.constant 0 : index
    %c0_7 = arith.constant 0 : index
    %9 = vector.load %arg4[%8, %c0_6, %c0_7] : memref<2x128x128xf32, #tpu.memory_space<vmem>>, vector<1x128x128xf32>
    %10 = vector.shape_cast %9 : vector<1x128x128xf32> to vector<128x128xf32>
    %cst_8 = arith.constant dense<0.000000e+00> : vector<128x128xf32>
    %11 = tpu.matmul %7, %10, %cst_8 {dimension_numbers = #tpu.dot_dimension_numbers<[1], [0], [0], [1], [0, 0, 1, 1], [], []>} : vector<128x128xf32>, vector<128x128xf32>, vector<128x128xf32> -> vector<128x128xf32>
    %12 = arith.index_cast %c0_i32 : i32 to index
    %c0_9 = arith.constant 0 : index
    %c0_10 = arith.constant 0 : index
    %13 = vector.load %arg5[%12, %c0_9, %c0_10] : memref<2x1x128xf32, #tpu.memory_space<vmem>>, vector<1x1x128xf32>
    %14 = vector.shape_cast %13 : vector<1x1x128xf32> to vector<1x128xf32>
    %15 = vector.broadcast %14 : vector<1x128xf32> to vector<128x128xf32>
    %16 = arith.addf %11, %15 : vector<128x128xf32>
    %cst_11 = arith.constant 0.000000e+00 : f32
    %17 = vector.broadcast %cst_11 : f32 to vector<128x128xf32>
    %18 = arith.maximumf %16, %17 : vector<128x128xf32>
    %c1_i32 = arith.constant 1 : i32
    %19 = arith.index_cast %c1_i32 : i32 to index
    %c0_12 = arith.constant 0 : index
    %c0_13 = arith.constant 0 : index
    %20 = vector.load %arg4[%19, %c0_12, %c0_13] : memref<2x128x128xf32, #tpu.memory_space<vmem>>, vector<1x128x128xf32>
    %21 = vector.shape_cast %20 : vector<1x128x128xf32> to vector<128x128xf32>
    %cst_14 = arith.constant dense<0.000000e+00> : vector<128x128xf32>
    %22 = tpu.matmul %18, %21, %cst_14 {dimension_numbers = #tpu.dot_dimension_numbers<[1], [0], [0], [1], [0, 0, 1, 1], [], []>} : vector<128x128xf32>, vector<128x128xf32>, vector<128x128xf32> -> vector<128x128xf32>
    %23 = arith.index_cast %c1_i32 : i32 to index
    %c0_15 = arith.constant 0 : index
    %c0_16 = arith.constant 0 : index
    %24 = vector.load %arg5[%23, %c0_15, %c0_16] : memref<2x1x128xf32, #tpu.memory_space<vmem>>, vector<1x1x128xf32>
    %25 = vector.shape_cast %24 : vector<1x1x128xf32> to vector<1x128xf32>
    %26 = vector.broadcast %25 : vector<1x128xf32> to vector<128x128xf32>
    %27 = arith.addf %22, %26 : vector<128x128xf32>
    %cst_17 = arith.constant 0.000000e+00 : f32
    %28 = vector.broadcast %cst_17 : f32 to vector<128x128xf32>
    %29 = arith.maximumf %27, %28 : vector<128x128xf32>
    %c2_i32 = arith.constant 2 : i32
    %c0_18 = arith.constant 0 : index
    %c0_19 = arith.constant 0 : index
    %30 = vector.load %arg6[%c0_18, %c0_19] : memref<128x128xf32, #tpu.memory_space<vmem>>, vector<128x128xf32>
    %cst_20 = arith.constant dense<0.000000e+00> : vector<128x128xf32>
    %31 = tpu.matmul %29, %30, %cst_20 {dimension_numbers = #tpu.dot_dimension_numbers<[1], [0], [0], [1], [0, 0, 1, 1], [], []>} : vector<128x128xf32>, vector<128x128xf32>, vector<128x128xf32> -> vector<128x128xf32>
    %c0_21 = arith.constant 0 : index
    %c0_22 = arith.constant 0 : index
    %32 = vector.load %arg7[%c0_21, %c0_22] : memref<1x128xf32, #tpu.memory_space<vmem>>, vector<1x128xf32>
    %33 = vector.broadcast %32 : vector<1x128xf32> to vector<128x128xf32>
    %34 = arith.addf %31, %33 : vector<128x128xf32>
    %35 = tpu.iota {dimensions = array<i32: 1>} : vector<128x128xi32>
    %c2_i32_23 = arith.constant 2 : i32
    %36 = vector.broadcast %c2_i32_23 : i32 to vector<128x128xi32>
    %37 = arith.cmpi slt, %35, %36 : vector<128x128xi32>
    %cst_24 = arith.constant -3.40282347E+38 : f32
    %38 = vector.broadcast %cst_24 : f32 to vector<128x128xf32>
    %39 = arith.select %37, %34, %38 : vector<128x128xi1>, vector<128x128xf32>
    %cst_25 = arith.constant dense<0xFF800000> : vector<128xf32>
    %40 = vector.multi_reduction <maximumf>, %39, %cst_25 [1] : vector<128x128xf32> to vector<128xf32>
    %41 = vector.shape_cast %40 : vector<128xf32> to vector<128x1xf32>
    %42 = vector.broadcast %41 : vector<128x1xf32> to vector<128x128xf32>
    %43 = arith.subf %39, %42 : vector<128x128xf32>
    %44 = math.exp %43 : vector<128x128xf32>
    %cst_26 = arith.constant dense<0.000000e+00> : vector<128xf32>
    %45 = vector.multi_reduction <add>, %44, %cst_26 [1] : vector<128x128xf32> to vector<128xf32>
    %46 = vector.shape_cast %45 : vector<128xf32> to vector<128x1xf32>
    %47 = vector.broadcast %46 : vector<128x1xf32> to vector<128x128xf32>
    %48 = arith.divf %44, %47 : vector<128x128xf32>
    %c0_27 = arith.constant 0 : index
    %c0_28 = arith.constant 0 : index
    %49 = vector.load %arg8[%c0_27, %c0_28] : memref<128x128xf32, #tpu.memory_space<vmem>>, vector<128x128xf32>
    tpu.vector_store %arg8[%c0_27, %c0_28], %48 {strides = array<i32>} : memref<128x128xf32, #tpu.memory_space<vmem>>, vector<128x128xf32>,
    return
  }
  func.func @transform_0(%arg0: i32) -> (i32, i32) {
    %c0_i32 = arith.constant 0 : i32
    %c0_i32_0 = arith.constant 0 : i32
    return %arg0, %c0_i32 : i32, i32
  }
  func.func @transform_1(%arg0: i32) -> (i32, i32) {
    %c0_i32 = arith.constant 0 : i32
    %c0_i32_0 = arith.constant 0 : i32
    %c0_i32_1 = arith.constant 0 : i32
    return %c0_i32, %c0_i32_0 : i32, i32
  }
  func.func @transform_2(%arg0: i32) -> (i32, i32) {
    %c0_i32 = arith.constant 0 : i32
    %c0_i32_0 = arith.constant 0 : i32
    %c0_i32_1 = arith.constant 0 : i32
    return %c0_i32, %c0_i32_0 : i32, i32
  }
  func.func @transform_3(%arg0: i32) -> (i32, i32, i32) {
    %c0_i32 = arith.constant 0 : i32
    %c0_i32_0 = arith.constant 0 : i32
    %c0_i32_1 = arith.constant 0 : i32
    %c0_i32_2 = arith.constant 0 : i32
    return %c0_i32, %c0_i32_0, %c0_i32_1 : i32, i32, i32
  }
  func.func @transform_4(%arg0: i32) -> (i32, i32, i32) {
    %c0_i32 = arith.constant 0 : i32
    %c0_i32_0 = arith.constant 0 : i32
    %c0_i32_1 = arith.constant 0 : i32
    %c0_i32_2 = arith.constant 0 : i32
    return %c0_i32, %c0_i32_0, %c0_i32_1 : i32, i32, i32
  }
  func.func @transform_5(%arg0: i32) -> (i32, i32) {
    %c0_i32 = arith.constant 0 : i32
    %c0_i32_0 = arith.constant 0 : i32
    %c0_i32_1 = arith.constant 0 : i32
    return %c0_i32, %c0_i32_0 : i32, i32
  }
  func.func @transform_6(%arg0: i32) -> (i32, i32) {
    %c0_i32 = arith.constant 0 : i32
    %c0_i32_0 = arith.constant 0 : i32
    %c0_i32_1 = arith.constant 0 : i32
    return %c0_i32, %c0_i32_0 : i32, i32
  }
  func.func @transform_7(%arg0: i32) -> (i32, i32) {
    %c0_i32 = arith.constant 0 : i32
    %c0_i32_0 = arith.constant 0 : i32
    return %arg0, %c0_i32 : i32, i32
  }
}

module attributes {stable_mosaic.version = 11 : i64} {
  func.func @mlp_softmax_kernel(%arg0: i32, %arg1: memref<128x128xf32, #tpu.memory_space<vmem>>, %arg2: memref<128x128xf32, #tpu.memory_space<vmem>>, %arg3: memref<1x128xf32, #tpu.memory_space<vmem>>, %arg4: memref<2x128x128xf32, #tpu.memory_space<vmem>>, %arg5: memref<2x1x128xf32, #tpu.memory_space<vmem>>, %arg6: memref<128x128xf32, #tpu.memory_space<vmem>>, %arg7: memref<1x128xf32, #tpu.memory_space<vmem>>, %arg8: memref<128x128xf32, #tpu.memory_space<vmem>>) attributes {dimension_semantics = [#tpu.dimension_semantics<parallel>], iteration_bounds = array<i64: 2>, scalar_prefetch = 0 : i64, scratch_operands = 0 : i64, tpu.core_type = #tpu.core_type<tc>, window_params = [{transform_indices = @transform_0, window_bounds = array<i64: 128, 128>}, {pipeline_mode = #tpu.pipeline_mode<synchronous>, transform_indices = @transform_1, window_bounds = array<i64: 128, 128>}, {pipeline_mode = #tpu.pipeline_mode<synchronous>, transform_indices = @transform_2, window_bounds = array<i64: 1, 128>}, {pipeline_mode = #tpu.pipeline_mode<synchronous>, transform_indices = @transform_3, window_bounds = array<i64: 2, 128, 128>}, {pipeline_mode = #tpu.pipeline_mode<synchronous>, transform_indices = @transform_4, window_bounds = array<i64: 2, 1, 128>}, {pipeline_mode = #tpu.pipeline_mode<synchronous>, transform_indices = @transform_5, window_bounds = array<i64: 128, 128>}, {pipeline_mode = #tpu.pipeline_mode<synchronous>, transform_indices = @transform_6, window_bounds = array<i64: 1, 128>}, {transform_indices = @transform_7, window_bounds = array<i64: 128, 128>}]} {
    %c0 = arith.constant 0 : index
    %c0_0 = arith.constant 0 : index
    %0 = vector.load %arg1[%c0, %c0_0] : memref<128x128xf32, #tpu.memory_space<vmem>>, vector<128x128xf32>
    %c0_1 = arith.constant 0 : index
    %c0_2 = arith.constant 0 : index
    %1 = vector.load %arg2[%c0_1, %c0_2] : memref<128x128xf32, #tpu.memory_space<vmem>>, vector<128x128xf32>
    %cst = arith.constant dense<0.000000e+00> : vector<128x128xf32>
    %2 = tpu.matmul %0, %1, %cst {dimension_numbers = #tpu.dot_dimension_numbers<[1], [0], [0], [1], [0, 0, 1, 1], [], []>} : vector<128x128xf32>, vector<128x128xf32>, vector<128x128xf32> -> vector<128x128xf32>
    %c0_3 = arith.constant 0 : index
    %c0_4 = arith.constant 0 : index
    %3 = vector.load %arg3[%c0_3, %c0_4] : memref<1x128xf32, #tpu.memory_space<vmem>>, vector<1x128xf32>
    %4 = vector.broadcast %3 : vector<1x128xf32> to vector<128x128xf32>
    %5 = arith.addf %2, %4 : vector<128x128xf32>
    %cst_5 = arith.constant 0.000000e+00 : f32
    %6 = vector.broadcast %cst_5 : f32 to vector<128x128xf32>
    %7 = arith.maximumf %5, %6 : vector<128x128xf32>
    %c0_i32 = arith.constant 0 : i32
    %8 = arith.index_cast %c0_i32 : i32 to index
    %c0_6 = arith.constant 0 : index
    %c0_7 = arith.constant 0 : index
    %9 = vector.load %arg4[%8, %c0_6, %c0_7] : memref<2x128x128xf32, #tpu.memory_space<vmem>>, vector<1x128x128xf32>
    %10 = vector.shape_cast %9 : vector<1x128x128xf32> to vector<128x128xf32>
    %cst_8 = arith.constant dense<0.000000e+00> : vector<128x128xf32>
    %11 = tpu.matmul %7, %10, %cst_8 {dimension_numbers = #tpu.dot_dimension_numbers<[1], [0], [0], [1], [0, 0, 1, 1], [], []>} : vector<128x128xf32>, vector<128x128xf32>, vector<128x128xf32> -> vector<128x128xf32>
    %12 = arith.index_cast %c0_i32 : i32 to index
    %c0_9 = arith.constant 0 : index
    %c0_10 = arith.constant 0 : index
    %13 = vector.load %arg5[%12, %c0_9, %c0_10] : memref<2x1x128xf32, #tpu.memory_space<vmem>>, vector<1x1x128xf32>
    %14 = vector.shape_cast %13 : vector<1x1x128xf32> to vector<1x128xf32>
    %15 = vector.broadcast %14 : vector<1x128xf32> to vector<128x128xf32>
    %16 = arith.addf %11, %15 : vector<128x128xf32>
    %cst_11 = arith.constant 0.000000e+00 : f32
    %17 = vector.broadcast %cst_11 : f32 to vector<128x128xf32>
    %18 = arith.maximumf %16, %17 : vector<128x128xf32>
    %c1_i32 = arith.constant 1 : i32
    %19 = arith.index_cast %c1_i32 : i32 to index
    %c0_12 = arith.constant 0 : index
    %c0_13 = arith.constant 0 : index
    %20 = vector.load %arg4[%19, %c0_12, %c0_13] : memref<2x128x128xf32, #tpu.memory_space<vmem>>, vector<1x128x128xf32>
    %21 = vector.shape_cast %20 : vector<1x128x128xf32> to vector<128x128xf32>
    %cst_14 = arith.constant dense<0.000000e+00> : vector<128x128xf32>
    %22 = tpu.matmul %18, %21, %cst_14 {dimension_numbers = #tpu.dot_dimension_numbers<[1], [0], [0], [1], [0, 0, 1, 1], [], []>} : vector<128x128xf32>, vector<128x128xf32>, vector<128x128xf32> -> vector<128x128xf32>
    %23 = arith.index_cast %c1_i32 : i32 to index
    %c0_15 = arith.constant 0 : index
    %c0_16 = arith.constant 0 : index
    %24 = vector.load %arg5[%23, %c0_15, %c0_16] : memref<2x1x128xf32, #tpu.memory_space<vmem>>, vector<1x1x128xf32>
    %25 = vector.shape_cast %24 : vector<1x1x128xf32> to vector<1x128xf32>
    %26 = vector.broadcast %25 : vector<1x128xf32> to vector<128x128xf32>
    %27 = arith.addf %22, %26 : vector<128x128xf32>
    %cst_17 = arith.constant 0.000000e+00 : f32
    %28 = vector.broadcast %cst_17 : f32 to vector<128x128xf32>
    %29 = arith.maximumf %27, %28 : vector<128x128xf32>
    %c2_i32 = arith.constant 2 : i32
    %c0_18 = arith.constant 0 : index
    %c0_19 = arith.constant 0 : index
    %30 = vector.load %arg6[%c0_18, %c0_19] : memref<128x128xf32, #tpu.memory_space<vmem>>, vector<128x128xf32>
    %cst_20 = arith.constant dense<0.000000e+00> : vector<128x128xf32>
    %31 = tpu.matmul %29, %30, %cst_20 {dimension_numbers = #tpu.dot_dimension_numbers<[1], [0], [0], [1], [0, 0, 1, 1], [], []>} : vector<128x128xf32>, vector<128x128xf32>, vector<128x128xf32> -> vector<128x128xf32>
    %c0_21 = arith.constant 0 : index
    %c0_22 = arith.constant 0 : index
    %32 = vector.load %arg7[%c0_21, %c0_22] : memref<1x128xf32, #tpu.memory_space<vmem>>, vector<1x128xf32>
    %33 = vector.broadcast %32 : vector<1x128xf32> to vector<128x128xf32>
    %34 = arith.addf %31, %33 : vector<128x128xf32>
    %35 = tpu.iota {dimensions = array<i32: 1>} : vector<128x128xi32>
    %c2_i32_23 = arith.constant 2 : i32
    %36 = vector.broadcast %c2_i32_23 : i32 to vector<128x128xi32>
    %37 = arith.cmpi slt, %35, %36 : vector<128x128xi32>
    %cst_24 = arith.constant -3.40282347E+38 : f32
    %38 = vector.broadcast %cst_24 : f32 to vector<128x128xf32>
    %39 = arith.select %37, %34, %38 : vector<128x128xi1>, vector<128x128xf32>
    %cst_25 = arith.constant dense<0xFF800000> : vector<128xf32>
    %40 = vector.multi_reduction <maximumf>, %39, %cst_25 [1] : vector<128x128xf32> to vector<128xf32>
    %41 = vector.shape_cast %40 : vector<128xf32> to vector<128x1xf32>
    %42 = vector.broadcast %41 : vector<128x1xf32> to vector<128x128xf32>
    %43 = arith.subf %39, %42 : vector<128x128xf32>
    %44 = math.exp %43 : vector<128x128xf32>
    %cst_26 = arith.constant dense<0.000000e+00> : vector<128xf32>
    %45 = vector.multi_reduction <add>, %44, %cst_26 [1] : vector<128x128xf32> to vector<128xf32>
    %46 = vector.shape_cast %45 : vector<128xf32> to vector<128x1xf32>
    %47 = vector.broadcast %46 : vector<128x1xf32> to vector<128x128xf32>
    %48 = arith.divf %44, %47 : vector<128x128xf32>
    %c0_27 = arith.constant 0 : index
    %c0_28 = arith.constant 0 : index
    %49 = vector.load %arg8[%c0_27, %c0_28] : memref<128x128xf32, #tpu.memory_space<vmem>>, vector<128x128xf32>
    tpu.vector_store %arg8[%c0_27, %c0_28], %48 {strides = array<i32>} : memref<128x128xf32, #tpu.memory_space<vmem>>, vector<128x128xf32>,
    return
  }
  func.func @transform_0(%arg0: i32) -> (i32, i32) {
    %c0_i32 = arith.constant 0 : i32
    %c0_i32_0 = arith.constant 0 : i32
    return %arg0, %c0_i32 : i32, i32
  }
  func.func @transform_1(%arg0: i32) -> (i32, i32) {
    %c0_i32 = arith.constant 0 : i32
    %c0_i32_0 = arith.constant 0 : i32
    %c0_i32_1 = arith.constant 0 : i32
    return %c0_i32, %c0_i32_0 : i32, i32
  }
  func.func @transform_2(%arg0: i32) -> (i32, i32) {
    %c0_i32 = arith.constant 0 : i32
    %c0_i32_0 = arith.constant 0 : i32
    %c0_i32_1 = arith.constant 0 : i32
    return %c0_i32, %c0_i32_0 : i32, i32
  }
  func.func @transform_3(%arg0: i32) -> (i32, i32, i32) {
    %c0_i32 = arith.constant 0 : i32
    %c0_i32_0 = arith.constant 0 : i32
    %c0_i32_1 = arith.constant 0 : i32
    %c0_i32_2 = arith.constant 0 : i32
    return %c0_i32, %c0_i32_0, %c0_i32_1 : i32, i32, i32
  }
  func.func @transform_4(%arg0: i32) -> (i32, i32, i32) {
    %c0_i32 = arith.constant 0 : i32
    %c0_i32_0 = arith.constant 0 : i32
    %c0_i32_1 = arith.constant 0 : i32
    %c0_i32_2 = arith.constant 0 : i32
    return %c0_i32, %c0_i32_0, %c0_i32_1 : i32, i32, i32
  }
  func.func @transform_5(%arg0: i32) -> (i32, i32) {
    %c0_i32 = arith.constant 0 : i32
    %c0_i32_0 = arith.constant 0 : i32
    %c0_i32_1 = arith.constant 0 : i32
    return %c0_i32, %c0_i32_0 : i32, i32
  }
  func.func @transform_6(%arg0: i32) -> (i32, i32) {
    %c0_i32 = arith.constant 0 : i32
    %c0_i32_0 = arith.constant 0 : i32
    %c0_i32_1 = arith.constant 0 : i32
    return %c0_i32, %c0_i32_0 : i32, i32
  }
  func.func @transform_7(%arg0: i32) -> (i32, i32) {
    %c0_i32 = arith.constant 0 : i32
    %c0_i32_0 = arith.constant 0 : i32
    return %arg0, %c0_i32 : i32, i32
  }
}

</mosaic_0001>

<llo_original>
// kernel: tpu_custom_call.1
$region0: #{tpu_custom_call.1}
  #allocation0 [shape = 'u32[]', space=smem, size = 0x4, offset = 0x4, fixed_abs, tag = 'smem constant byte address 0x4 - core index']
  #allocation1 [shape = 'u32[144,128]{1,0:T(1,128)}', space=vmem, size = 0x12000, scoped, tag = 'internal scratch']
  %s0 = inlined_call_operand.hbm [shape: f32[256,128], index: 0, kind: input, shape index: {}]
  %s1 = inlined_call_operand.hbm [shape: f32[128,128], index: 1, kind: input, shape index: {}]
  %s2 = inlined_call_operand.vmem [shape: f32[1,128], index: 2, kind: input, shape index: {}]
  %s3 = inlined_call_operand.hbm [shape: f32[2,128,128], index: 3, kind: input, shape index: {}]
  %s4 = inlined_call_operand.vmem [shape: f32[2,1,128], index: 4, kind: input, shape index: {}]
  %s5 = inlined_call_operand.hbm [shape: f32[128,128], index: 5, kind: input, shape index: {}]
  %s6 = inlined_call_operand.vmem [shape: f32[1,128], index: 6, kind: input, shape index: {}]
  %s7 = inlined_call_operand.hbm [shape: f32[256,128], index: 7, kind: output, shape index: {}]
  %s8 = sld [smem:[#allocation0]]
  $region77: #{tpu_custom_call.1} parent=0
    _
  %s10 = ssub.s32 1, %s8
  %s11 = scalar_select 0, %s10, %s8
  $region1: #{tpu_custom_call.1} parent=0
    #allocation2 [shape = 'u8[131072]{0}', space=vmem, size = 0x20000, scoped, tag = 'input window, operand 0']
    #allocation3 [shape = 's32[2]{0}', space=sflag, size = 0x8, scoped, tag = 'scoped memory for tpu_custom_call.1']
    #allocation4 [shape = 's32[2]{0}', space=sflag, size = 0x8, scoped, tag = 'scoped memory for tpu_custom_call.1']
    #allocation5 [shape = 'u8[65536]{0}', space=vmem, size = 0x10000, scoped, tag = 'input window, operand 1, single buffered']
    #allocation6 [shape = 's32[1]{0}', space=sflag, size = 0x4, scoped, tag = 'scoped memory for tpu_custom_call.1']
    #allocation7 [shape = 'u8[131072]{0}', space=vmem, size = 0x20000, scoped, tag = 'input window, operand 3, single buffered']
    #allocation8 [shape = 'u8[65536]{0}', space=vmem, size = 0x10000, scoped, tag = 'input window, operand 5, single buffered']
    #allocation9 [shape = 's32[1]{0}', space=sflag, size = 0x4, scoped, tag = 'scoped memory for tpu_custom_call.1']
    #allocation10 [shape = 'u8[131072]{0}', space=vmem, size = 0x20000, scoped, tag = 'output window, operand 0']
    %12 = vsyncpa [#allocation3], 0
    %s13 = scalar_lea.sflag [#allocation3], 1
    %14 = vsyncpa %s13, 0
    %15 = vsyncpa [#allocation6], 0
    %16 = vsyncpa [#allocation9], 0
    %17 = vsyncpa [#allocation4], 0
    %s18 = scalar_lea.sflag [#allocation4], 1
    %19 = vsyncpa %s18, 0
    loop: start=0, step=1, limit=4
    $region2: #{tpu_custom_call.1} parent=1 // loop_pre_header
      _
    $region3: #{tpu_custom_call.1} parent=1 // loop_header
      %s21 = sphi 0, %s25
      %p22 = scmp.ge.s32.totalorder %s21, 4
      %s31 = sphi 0, %s33
      %s34 = sphi 0, %s31
      %s35 = sphi 0, %s34
      %s51 = sphi 0, %s35
      %s55 = sphi 0, %s55
      %s57 = sphi 0, %s55
      %s58 = sphi 0, %s57
      %s72 = sphi 0, %s58
      %s76 = sphi 0, %s76
      %s78 = sphi 0, %s76
      %s79 = sphi 0, %s78
      %s93 = sphi 0, %s79
      %s97 = sphi 0, %s97
      %s99 = sphi 0, %s97
      %s100 = sphi 0, %s99
      %s114 = sphi 0, %s100
      %s118 = sphi 0, %s118
      %s120 = sphi 0, %s118
      %s121 = sphi 0, %s120
      %s135 = sphi 0, %s121
      %s139 = sphi 0, %s139
      %s141 = sphi 0, %s139
      %s142 = sphi 0, %s141
      %s156 = sphi 0, %s142
      %s160 = sphi 0, %s160
      %s162 = sphi 0, %s160
      %s163 = sphi 0, %s162
      %s177 = sphi 0, %s163
      %s183 = sphi 0, %s185
      %s186 = sphi 0, %s183
      %s187 = sphi 0, %s186
      %s203 = sphi 0, %s187
    $region4: #{tpu_custom_call.1} parent=1 // loop_header_branch
      %24 = sbr.rel (%p22) target = $region8
    $region5: #{tpu_custom_call.1} parent=1 // loop_body
      %s26 = ssub.s32 %s21, 1
      %s27 = ssub.s32 %s21, 2
      %s28 = sadd.s32 %s21, 1
      %s29 = ssub.s32 %s21, %s28
      %p30 = scmp.eq.s32.totalorder %s29, 0
      %s32 = sadd.s32 %s31, 1
      %s33 = scalar_select %p30, %s31, %s32
      %p36 = pneg %p30
      %p37 = scmp.eq.s32.totalorder %s21, 1
      %p38 = por %p36, %p37
      %p39 = scmp.ne.s32.totalorder %s31, %s34
      %p40 = scmp.eq.s32.totalorder %s21, 0
      %p41 = por %p39, %p40
      %p42 = scmp.ne.s32.totalorder %s31, %s34
      %p43 = scmp.eq.s32.totalorder %s26, 1
      %p44 = por %p42, %p43
      %p45 = scmp.ne.s32.totalorder %s34, %s35
      %p46 = scmp.eq.s32.totalorder %s26, 0
      %p47 = por %p45, %p46
      %p48 = scmp.ne.s32.totalorder %s34, %s35
      %p49 = scmp.eq.s32.totalorder %s27, 1
      %p50 = por %p48, %p49
      %p52 = scmp.ne.s32.totalorder %s35, %s51
      %p53 = scmp.eq.s32.totalorder %s27, 0
      %p54 = por %p52, %p53
      %s56 = sadd.s32 %s55, 1
      %p59 = scmp.eq.s32.totalorder %s21, 1
      %p60 = scmp.ne.s32.totalorder %s55, %s57
      %p61 = scmp.eq.s32.totalorder %s21, 0
      %p62 = por %p60, %p61
      %p63 = scmp.ne.s32.totalorder %s55, %s57
      %p64 = scmp.eq.s32.totalorder %s26, 1
      %p65 = por %p63, %p64
      %p66 = scmp.ne.s32.totalorder %s57, %s58
      %p67 = scmp.eq.s32.totalorder %s26, 0
      %p68 = por %p66, %p67
      %p69 = scmp.ne.s32.totalorder %s57, %s58
      %p70 = scmp.eq.s32.totalorder %s27, 1
      %p71 = por %p69, %p70
      %p73 = scmp.ne.s32.totalorder %s58, %s72
      %p74 = scmp.eq.s32.totalorder %s27, 0
      %p75 = por %p73, %p74
      %s77 = sadd.s32 %s76, 1
      %p80 = scmp.eq.s32.totalorder %s21, 1
      %p81 = scmp.ne.s32.totalorder %s76, %s78
      %p82 = scmp.eq.s32.totalorder %s21, 0
      %p83 = por %p81, %p82
      %p84 = scmp.ne.s32.totalorder %s76, %s78
      %p85 = scmp.eq.s32.totalorder %s26, 1
      %p86 = por %p84, %p85
      %p87 = scmp.ne.s32.totalorder %s78, %s79
      %p88 = scmp.eq.s32.totalorder %s26, 0
      %p89 = por %p87, %p88
      %p90 = scmp.ne.s32.totalorder %s78, %s79
      %p91 = scmp.eq.s32.totalorder %s27, 1
      %p92 = por %p90, %p91
      %p94 = scmp.ne.s32.totalorder %s79, %s93
      %p95 = scmp.eq.s32.totalorder %s27, 0
      %p96 = por %p94, %p95
      %s98 = sadd.s32 %s97, 1
      %p101 = scmp.eq.s32.totalorder %s21, 1
      %p102 = scmp.ne.s32.totalorder %s97, %s99
      %p103 = scmp.eq.s32.totalorder %s21, 0
      %p104 = por %p102, %p103
      %p105 = scmp.ne.s32.totalorder %s97, %s99
      %p106 = scmp.eq.s32.totalorder %s26, 1
      %p107 = por %p105, %p106
      %p108 = scmp.ne.s32.totalorder %s99, %s100
      %p109 = scmp.eq.s32.totalorder %s26, 0
      %p110 = por %p108, %p109
      %p111 = scmp.ne.s32.totalorder %s99, %s100
      %p112 = scmp.eq.s32.totalorder %s27, 1
      %p113 = por %p111, %p112
      %p115 = scmp.ne.s32.totalorder %s100, %s114
      %p116 = scmp.eq.s32.totalorder %s27, 0
      %p117 = por %p115, %p116
      %s119 = sadd.s32 %s118, 1
      %p122 = scmp.eq.s32.totalorder %s21, 1
      %p123 = scmp.ne.s32.totalorder %s118, %s120
      %p124 = scmp.eq.s32.totalorder %s21, 0
      %p125 = por %p123, %p124
      %p126 = scmp.ne.s32.totalorder %s118, %s120
      %p127 = scmp.eq.s32.totalorder %s26, 1
      %p128 = por %p126, %p127
      %p129 = scmp.ne.s32.totalorder %s120, %s121
      %p130 = scmp.eq.s32.totalorder %s26, 0
      %p131 = por %p129, %p130
      %p132 = scmp.ne.s32.totalorder %s120, %s121
      %p133 = scmp.eq.s32.totalorder %s27, 1
      %p134 = por %p132, %p133
      %p136 = scmp.ne.s32.totalorder %s121, %s135
      %p137 = scmp.eq.s32.totalorder %s27, 0
      %p138 = por %p136, %p137
      %s140 = sadd.s32 %s139, 1
      %p143 = scmp.eq.s32.totalorder %s21, 1
      %p144 = scmp.ne.s32.totalorder %s139, %s141
      %p145 = scmp.eq.s32.totalorder %s21, 0
      %p146 = por %p144, %p145
      %p147 = scmp.ne.s32.totalorder %s139, %s141
      %p148 = scmp.eq.s32.totalorder %s26, 1
      %p149 = por %p147, %p148
      %p150 = scmp.ne.s32.totalorder %s141, %s142
      %p151 = scmp.eq.s32.totalorder %s26, 0
      %p152 = por %p150, %p151
      %p153 = scmp.ne.s32.totalorder %s141, %s142
      %p154 = scmp.eq.s32.totalorder %s27, 1
      %p155 = por %p153, %p154
      %p157 = scmp.ne.s32.totalorder %s142, %s156
      %p158 = scmp.eq.s32.totalorder %s27, 0
      %p159 = por %p157, %p158
      %s161 = sadd.s32 %s160, 1
      %p164 = scmp.eq.s32.totalorder %s21, 1
      %p165 = scmp.ne.s32.totalorder %s160, %s162
      %p166 = scmp.eq.s32.totalorder %s21, 0
      %p167 = por %p165, %p166
      %p168 = scmp.ne.s32.totalorder %s160, %s162
      %p169 = scmp.eq.s32.totalorder %s26, 1
      %p170 = por %p168, %p169
      %p171 = scmp.ne.s32.totalorder %s162, %s163
      %p172 = scmp.eq.s32.totalorder %s26, 0
      %p173 = por %p171, %p172
      %p174 = scmp.ne.s32.totalorder %s162, %s163
      %p175 = scmp.eq.s32.totalorder %s27, 1
      %p176 = por %p174, %p175
      %p178 = scmp.ne.s32.totalorder %s163, %s177
      %p179 = scmp.eq.s32.totalorder %s27, 0
      %p180 = por %p178, %p179
      %s181 = ssub.s32 %s21, %s28
      %p182 = scmp.eq.s32.totalorder %s181, 0
      %s184 = sadd.s32 %s183, 1
      %s185 = scalar_select %p182, %s183, %s184
      %p188 = pneg %p182
      %p189 = scmp.eq.s32.totalorder %s21, 1
      %p190 = por %p188, %p189
      %p191 = scmp.ne.s32.totalorder %s183, %s186
      %p192 = scmp.eq.s32.totalorder %s21, 0
      %p193 = por %p191, %p192
      %p194 = scmp.ne.s32.totalorder %s183, %s186
      %p195 = scmp.eq.s32.totalorder %s26, 1
      %p196 = por %p194, %p195
      %p197 = scmp.ne.s32.totalorder %s186, %s187
      %p198 = scmp.eq.s32.totalorder %s26, 0
      %p199 = por %p197, %p198
      %p200 = scmp.ne.s32.totalorder %s186, %s187
      %p201 = scmp.eq.s32.totalorder %s27, 1
      %p202 = por %p200, %p201
      %p204 = scmp.ne.s32.totalorder %s187, %s203
      %p205 = scmp.eq.s32.totalorder %s27, 0
      %p206 = por %p204, %p205
      %p207 = scmp.le.s32.totalorder 1, %s21
      %p208 = scmp.lt.s32.totalorder %s21, 3
      %p209 = pnand %p207, %p208
      %p210 = pneg %p209
      // Predicated region
      $region9: #{tpu_custom_call.1} parent=5 // pred_check
        _
      $region10: #{tpu_custom_call.1} parent=5 // pred_check_branch
        %212 = sbr.rel (%p209) target = $region12
      $region11: #{tpu_custom_call.1} parent=5 // pred_region
        %s213 = ssub.s32 %s21, 1
        // Predicated region
        $region13: #{tpu_custom_call.1} parent=11 // pred_check
          %p214 = pneg %p68
        $region14: #{tpu_custom_call.1} parent=11 // pred_check_branch
          %216 = sbr.rel (%p214) target = $region16
        $region15: #{tpu_custom_call.1} parent=11 // pred_region
          %s218 = ssub.s32 2048, 2048
          %219 = vsyncadd [#allocation6], %s218
          %s220 = sshll.u32 [#allocation5], 4
          %s221 = int_to_ptr.vmem [resolvable:$true] %s220
          %226 = dma.hbm_to_vmem [thread:$0]  %s1, 2048, %s221, [#allocation6], 128, 128, 8
        $region16: #{tpu_custom_call.1} parent=11 // pred_fallthru
          _
        // Predicated region
        $region17: #{tpu_custom_call.1} parent=11 // pred_check
          %p227 = pneg %p89
        $region18: #{tpu_custom_call.1} parent=11 // pred_check_branch
          %229 = sbr.rel (%p227) target = $region20
        $region19: #{tpu_custom_call.1} parent=11 // pred_region
          _
        $region20: #{tpu_custom_call.1} parent=11 // pred_fallthru
          _
        // Predicated region
        $region21: #{tpu_custom_call.1} parent=11 // pred_check
          %p230 = pneg %p110
        $region22: #{tpu_custom_call.1} parent=11 // pred_check_branch
          %232 = sbr.rel (%p230) target = $region24
        $region23: #{tpu_custom_call.1} parent=11 // pred_region
          %s234 = ssub.s32 4096, 4096
          %235 = vsyncadd [#allocation6], %s234
          %s236 = sshll.u32 [#allocation7], 4
          %s237 = int_to_ptr.vmem [resolvable:$true] %s236
          %242 = dma.hbm_to_vmem [thread:$0]  %s3, 4096, %s237, [#allocation6], 128, 128, 8
        $region24: #{tpu_custom_call.1} parent=11 // pred_fallthru
          _
        // Predicated region
        $region25: #{tpu_custom_call.1} parent=11 // pred_check
          %p243 = pneg %p131
        $region26: #{tpu_custom_call.1} parent=11 // pred_check_branch
          %245 = sbr.rel (%p243) target = $region28
        $region27: #{tpu_custom_call.1} parent=11 // pred_region
          _
        $region28: #{tpu_custom_call.1} parent=11 // pred_fallthru
          _
        // Predicated region
        $region29: #{tpu_custom_call.1} parent=11 // pred_check
          %p246 = pneg %p152
        $region30: #{tpu_custom_call.1} parent=11 // pred_check_branch
          %248 = sbr.rel (%p246) target = $region32
        $region31: #{tpu_custom_call.1} parent=11 // pred_region
          %s250 = ssub.s32 2048, 2048
          %251 = vsyncadd [#allocation9], %s250
          %s252 = sshll.u32 [#allocation8], 4
          %s253 = int_to_ptr.vmem [resolvable:$true] %s252
          %258 = dma.hbm_to_vmem [thread:$0]  %s5, 2048, %s253, [#allocation9], 128, 128, 8
        $region32: #{tpu_custom_call.1} parent=11 // pred_fallthru
          _
        // Predicated region
        $region33: #{tpu_custom_call.1} parent=11 // pred_check
          %p259 = pneg %p173
        $region34: #{tpu_custom_call.1} parent=11 // pred_check_branch
          %261 = sbr.rel (%p259) target = $region36
        $region35: #{tpu_custom_call.1} parent=11 // pred_region
          _
        $region36: #{tpu_custom_call.1} parent=11 // pred_fallthru
          _
      $region12: #{tpu_custom_call.1} parent=5 // pred_fallthru
        _
      %p262 = scmp.lt.s32.totalorder %s21, 2
      // Predicated region
      $region37: #{tpu_custom_call.1} parent=5 // pred_check
        %p263 = pneg %p262
      $region38: #{tpu_custom_call.1} parent=5 // pred_check_branch
        %265 = sbr.rel (%p263) target = $region40
      $region39: #{tpu_custom_call.1} parent=5 // pred_region
        // Predicated region
        $region41: #{tpu_custom_call.1} parent=39 // pred_check
          %p266 = pneg %p41
        $region42: #{tpu_custom_call.1} parent=39 // pred_check_branch
          %268 = sbr.rel (%p266) target = $region44
        $region43: #{tpu_custom_call.1} parent=39 // pred_region
          %s269 = sand.u32 %s31, 1
          %s270 = scalar_lea.sflag [#allocation3], %s269
          %s271 = sand.u32 %s31, 1
          %s272 = smul.addr %s271, 128
          %s273 = scalar_lea.vmem [#allocation2], %s272
          %s274 = smul.u32 16, %s21
          %s276 = ssub.s32 2048, 2048
          %277 = vsyncadd %s270, %s276
          %s278 = smul.addr %s274, 128
          %s279 = scalar_lea.hbm %s0, %s278
          %s280 = sshll.u32 %s273, 4
          %s281 = int_to_ptr.vmem [resolvable:$true] %s280
          %286 = dma.hbm_to_vmem [thread:$0]  %s279, 2048, %s281, %s270, 128, 128, 8
        $region44: #{tpu_custom_call.1} parent=39 // pred_fallthru
          _
      $region40: #{tpu_custom_call.1} parent=5 // pred_fallthru
        _
      %p287 = scmp.le.s32.totalorder 1, %s21
      %p288 = scmp.lt.s32.totalorder %s21, 3
      %p289 = pnand %p287, %p288
      %p290 = pneg %p289
      // Predicated region
      $region45: #{tpu_custom_call.1} parent=5 // pred_check
        _
      $region46: #{tpu_custom_call.1} parent=5 // pred_check_branch
        %292 = sbr.rel (%p289) target = $region48
      $region47: #{tpu_custom_call.1} parent=5 // pred_region
        %s293 = ssub.s32 %s21, 1
        %s294 = sand.u32 %s34, 1
        %s295 = scalar_lea.sflag [#allocation3], %s294
        %s296 = sand.u32 %s34, 1
        %s297 = smul.addr %s296, 128
        %s298 = scalar_lea.vmem [#allocation2], %s297
        // Predicated region
        $region49: #{tpu_custom_call.1} parent=47 // pred_check
          %p299 = pneg %p47
        $region50: #{tpu_custom_call.1} parent=47 // pred_check_branch
          %301 = sbr.rel (%p299) target = $region52
        $region51: #{tpu_custom_call.1} parent=47 // pred_region
          %302 = dma.done %s295, 2048
        $region52: #{tpu_custom_call.1} parent=47 // pred_fallthru
          _
        // Predicated region
        $region53: #{tpu_custom_call.1} parent=47 // pred_check
          %p303 = pneg %p68
        $region54: #{tpu_custom_call.1} parent=47 // pred_check_branch
          %305 = sbr.rel (%p303) target = $region56
        $region55: #{tpu_custom_call.1} parent=47 // pred_region
          %306 = dma.done [#allocation6], 2048
        $region56: #{tpu_custom_call.1} parent=47 // pred_fallthru
          _
        // Predicated region
        $region57: #{tpu_custom_call.1} parent=47 // pred_check
          %p307 = pneg %p110
        $region58: #{tpu_custom_call.1} parent=47 // pred_check_branch
          %309 = sbr.rel (%p307) target = $region60
        $region59: #{tpu_custom_call.1} parent=47 // pred_region
          %310 = dma.done [#allocation6], 4096
        $region60: #{tpu_custom_call.1} parent=47 // pred_fallthru
          _
        // Predicated region
        $region61: #{tpu_custom_call.1} parent=47 // pred_check
          %p311 = pneg %p152
        $region62: #{tpu_custom_call.1} parent=47 // pred_check_branch
          %313 = sbr.rel (%p311) target = $region64
        $region63: #{tpu_custom_call.1} parent=47 // pred_region
          %314 = dma.done [#allocation9], 2048
        $region64: #{tpu_custom_call.1} parent=47 // pred_fallthru
          _
        %s315 = sand.u32 %s34, 1
        %s316 = scalar_lea.sflag [#allocation3], %s315
        %s317 = sand.u32 %s34, 1
        %s318 = smul.addr %s317, 128
        %s319 = scalar_lea.vmem [#allocation2], %s318
        %p320 = pneg %p47
        %p321 = pneg %p44
        %p322 = pneg %p68
        %p323 = pneg %p65
        %p324 = pneg %p89
        %p325 = pneg %p86
        %p326 = pneg %p110
        %p327 = pneg %p107
        %p328 = pneg %p131
        %p329 = pneg %p128
        %p330 = pneg %p152
        %p331 = pneg %p149
        %p332 = pneg %p173
        %p333 = pneg %p170
        %p334 = pneg %p199
        %p335 = pneg %p196
        %s336 = sand.u32 %s186, 1
        %s337 = scalar_lea.sflag [#allocation4], %s336
        %s338 = sand.u32 %s186, 1
        %s339 = smul.addr %s338, 128
        %s340 = scalar_lea.vmem [#allocation10], %s339
        %s341 = smul.u32 16, %s26
        %s342 = smul.u32 16, %s26
        %v343 = vld [vmem:[%s298] sm:$0xff]
        %v344 = vld [vmem:[%s298 + $0x8] sm:$0xff]
        %v345 = vld [vmem:[%s298 + $0x10] sm:$0xff]
        %v346 = vld [vmem:[%s298 + $0x18] sm:$0xff]
        %v347 = vld [vmem:[%s298 + $0x20] sm:$0xff]
        %v348 = vld [vmem:[%s298 + $0x28] sm:$0xff]
        %v349 = vld [vmem:[%s298 + $0x30] sm:$0xff]
        %v350 = vld [vmem:[%s298 + $0x38] sm:$0xff]
        %v351 = vld [vmem:[%s298 + $0x40] sm:$0xff]
        %v352 = vld [vmem:[%s298 + $0x48] sm:$0xff]
        %v353 = vld [vmem:[%s298 + $0x50] sm:$0xff]
        %v354 = vld [vmem:[%s298 + $0x58] sm:$0xff]
        %v355 = vld [vmem:[%s298 + $0x60] sm:$0xff]
        %v356 = vld [vmem:[%s298 + $0x68] sm:$0xff]
        %v357 = vld [vmem:[%s298 + $0x70] sm:$0xff]
        %v358 = vld [vmem:[%s298 + $0x78] sm:$0xff]
        %v359 = vld [vmem:[#allocation5] sm:$0xff]
        %v360 = vld [vmem:[#allocation5 + $0x8] sm:$0xff]
        %v361 = vld [vmem:[#allocation5 + $0x10] sm:$0xff]
        %v362 = vld [vmem:[#allocation5 + $0x18] sm:$0xff]
        %v363 = vld [vmem:[#allocation5 + $0x20] sm:$0xff]
        %v364 = vld [vmem:[#allocation5 + $0x28] sm:$0xff]
        %v365 = vld [vmem:[#allocation5 + $0x30] sm:$0xff]
        %v366 = vld [vmem:[#allocation5 + $0x38] sm:$0xff]
        %v367 = vld [vmem:[#allocation5 + $0x40] sm:$0xff]
        %v368 = vld [vmem:[#allocation5 + $0x48] sm:$0xff]
        %v369 = vld [vmem:[#allocation5 + $0x50] sm:$0xff]
        %v370 = vld [vmem:[#allocation5 + $0x58] sm:$0xff]
        %v371 = vld [vmem:[#allocation5 + $0x60] sm:$0xff]
        %v372 = vld [vmem:[#allocation5 + $0x68] sm:$0xff]
        %v373 = vld [vmem:[#allocation5 + $0x70] sm:$0xff]
        %v374 = vld [vmem:[#allocation5 + $0x78] sm:$0xff]
        %v375 = vld [vmem:[%s2] sm:$0x1]
        %v377 = vlaneseq
        %v378 = vshrl.u32 %v377, 7
        %v379 = vsub.s32 0, %v378
        %v380 = vrot.slane %v375, %v379
        %382 = vmatprep.subr.mxu0 0.0
        %383 = vmatpush1.msra.mxu0 %v374
        %384 = vmatprep.subr.mxu0 0.0
        %385 = vmatpush1.msra.mxu0 %v373
        %386 = vmatprep.subr.mxu0 0.0
        %387 = vmatpush1.msra.mxu0 %v372
        %388 = vmatprep.subr.mxu0 0.0
        %389 = vmatpush1.msra.mxu0 %v371
        %390 = vmatprep.subr.mxu0 0.0
        %391 = vmatpush1.msra.mxu0 %v370
        %392 = vmatprep.subr.mxu0 0.0
        %393 = vmatpush1.msra.mxu0 %v369
        %394 = vmatprep.subr.mxu0 0.0
        %395 = vmatpush1.msra.mxu0 %v368
        %396 = vmatprep.subr.mxu0 0.0
        %397 = vmatpush1.msra.mxu0 %v367
        %398 = vmatprep.subr.mxu0 0.0
        %399 = vmatpush1.msra.mxu0 %v366
        %400 = vmatprep.subr.mxu0 0.0
        %401 = vmatpush1.msra.mxu0 %v365
        %402 = vmatprep.subr.mxu0 0.0
        %403 = vmatpush1.msra.mxu0 %v364
        %404 = vmatprep.subr.mxu0 0.0
        %405 = vmatpush1.msra.mxu0 %v363
        %406 = vmatprep.subr.mxu0 0.0
        %407 = vmatpush1.msra.mxu0 %v362
        %408 = vmatprep.subr.mxu0 0.0
        %409 = vmatpush1.msra.mxu0 %v361
        %410 = vmatprep.subr.mxu0 0.0
        %411 = vmatpush1.msra.mxu0 %v360
        %412 = vmatprep.subr.mxu0 0.0
        %413 = vmatpush1.msra.mxu0 %v359
        %414 = vmatprep.subr.mxu0 0.0
        %415 = vmatpush2.msra.mxu0 0.0
        %416 = vmatprep.subr.mxu0 0.0
        %417 = vmatpush2.msra.mxu0 0.0
        %418 = vmatprep.subr.mxu0 0.0
        %419 = vmatpush2.msra.mxu0 0.0
        %420 = vmatprep.subr.mxu0 0.0
        %421 = vmatpush2.msra.mxu0 0.0
        %422 = vmatprep.subr.mxu0 0.0
        %423 = vmatpush2.msra.mxu0 0.0
        %424 = vmatprep.subr.mxu0 0.0
        %425 = vmatpush2.msra.mxu0 0.0
        %426 = vmatprep.subr.mxu0 0.0
        %427 = vmatpush2.msra.mxu0 0.0
        %428 = vmatprep.subr.mxu0 0.0
        %429 = vmatpush2.msra.mxu0 0.0
        %430 = vmatprep.subr.mxu0 0.0
        %431 = vmatpush2.msra.mxu0 0.0
        %432 = vmatprep.subr.mxu0 0.0
        %433 = vmatpush2.msra.mxu0 0.0
        %434 = vmatprep.subr.mxu0 0.0
        %435 = vmatpush2.msra.mxu0 0.0
        %436 = vmatprep.subr.mxu0 0.0
        %437 = vmatpush2.msra.mxu0 0.0
        %438 = vmatprep.subr.mxu0 0.0
        %439 = vmatpush2.msra.mxu0 0.0
        %440 = vmatprep.subr.mxu0 0.0
        %441 = vmatpush2.msra.mxu0 0.0
        %442 = vmatprep.subr.mxu0 0.0
        %443 = vmatpush2.msra.mxu0 0.0
        %444 = vmatprep.subr.mxu0 0.0
        %445 = vmatpush2.msra.mxu0 0.0
        %446 = vmatprep.mubr.f32.mxu0 0.0
        %447 = vmatmul.mubr.f32.gmra.mxu0 %v343
        %v448 = vpop.f32.mrf.mxu0
        %v449 = vadd.f32 %v380, %v448
        %v450 = vpop.f32.mrf.mxu0
        %451 = vmatprep.mubr.f32.mxu0 0.0
        %452 = vmatmul.mubr.f32.gmra.mxu0 %v344
        %v453 = vpop.f32.mrf.mxu0
        %v454 = vadd.f32 %v380, %v453
        %v455 = vpop.f32.mrf.mxu0
        %456 = vmatprep.mubr.f32.mxu0 0.0
        %457 = vmatmul.mubr.f32.gmra.mxu0 %v345
        %v458 = vpop.f32.mrf.mxu0
        %v459 = vadd.f32 %v380, %v458
        %v460 = vpop.f32.mrf.mxu0
        %461 = vmatprep.mubr.f32.mxu0 0.0
        %462 = vmatmul.mubr.f32.gmra.mxu0 %v346
        %v463 = vpop.f32.mrf.mxu0
        %v464 = vadd.f32 %v380, %v463
        %v465 = vpop.f32.mrf.mxu0
        %466 = vmatprep.mubr.f32.mxu0 0.0
        %467 = vmatmul.mubr.f32.gmra.mxu0 %v347
        %v468 = vpop.f32.mrf.mxu0
        %v469 = vadd.f32 %v380, %v468
        %v470 = vpop.f32.mrf.mxu0
        %471 = vmatprep.mubr.f32.mxu0 0.0
        %472 = vmatmul.mubr.f32.gmra.mxu0 %v348
        %v473 = vpop.f32.mrf.mxu0
        %v474 = vadd.f32 %v380, %v473
        %v475 = vpop.f32.mrf.mxu0
        %476 = vmatprep.mubr.f32.mxu0 0.0
        %477 = vmatmul.mubr.f32.gmra.mxu0 %v349
        %v478 = vpop.f32.mrf.mxu0
        %v479 = vadd.f32 %v380, %v478
        %v480 = vpop.f32.mrf.mxu0
        %481 = vmatprep.mubr.f32.mxu0 0.0
        %482 = vmatmul.mubr.f32.gmra.mxu0 %v350
        %v483 = vpop.f32.mrf.mxu0
        %v484 = vadd.f32 %v380, %v483
        %v485 = vpop.f32.mrf.mxu0
        %486 = vmatprep.mubr.f32.mxu0 0.0
        %487 = vmatmul.mubr.f32.gmra.mxu0 %v351
        %v488 = vpop.f32.mrf.mxu0
        %v489 = vadd.f32 %v380, %v488
        %v490 = vpop.f32.mrf.mxu0
        %491 = vmatprep.mubr.f32.mxu0 0.0
        %492 = vmatmul.mubr.f32.gmra.mxu0 %v352
        %v493 = vpop.f32.mrf.mxu0
        %v494 = vadd.f32 %v380, %v493
        %v495 = vpop.f32.mrf.mxu0
        %496 = vmatprep.mubr.f32.mxu0 0.0
        %497 = vmatmul.mubr.f32.gmra.mxu0 %v353
        %v498 = vpop.f32.mrf.mxu0
        %v499 = vadd.f32 %v380, %v498
        %v500 = vpop.f32.mrf.mxu0
        %501 = vmatprep.mubr.f32.mxu0 0.0
        %502 = vmatmul.mubr.f32.gmra.mxu0 %v354
        %v503 = vpop.f32.mrf.mxu0
        %v504 = vadd.f32 %v380, %v503
        %v505 = vpop.f32.mrf.mxu0
        %506 = vmatprep.mubr.f32.mxu0 0.0
        %507 = vmatmul.mubr.f32.gmra.mxu0 %v355
        %v508 = vpop.f32.mrf.mxu0
        %v509 = vadd.f32 %v380, %v508
        %v510 = vpop.f32.mrf.mxu0
        %511 = vmatprep.mubr.f32.mxu0 0.0
        %512 = vmatmul.mubr.f32.gmra.mxu0 %v356
        %v513 = vpop.f32.mrf.mxu0
        %v514 = vadd.f32 %v380, %v513
        %v515 = vpop.f32.mrf.mxu0
        %516 = vmatprep.mubr.f32.mxu0 0.0
        %517 = vmatmul.mubr.f32.gmra.mxu0 %v357
        %v518 = vpop.f32.mrf.mxu0
        %v519 = vadd.f32 %v380, %v518
        %v520 = vpop.f32.mrf.mxu0
        %521 = vmatprep.mubr.f32.mxu0 0.0
        %522 = vmatmul.mubr.f32.gmra.mxu0 %v358
        %v523 = vpop.f32.mrf.mxu0
        %v524 = vadd.f32 %v380, %v523
        %v525 = vpop.f32.mrf.mxu0
        %526 = vdwg.mxu0
        %v527 = vmax.f32 %v449, 0.0
        %v528 = vmax.f32 %v454, 0.0
        %v529 = vmax.f32 %v459, 0.0
        %v530 = vmax.f32 %v464, 0.0
        %v531 = vmax.f32 %v469, 0.0
        %v532 = vmax.f32 %v474, 0.0
        %v533 = vmax.f32 %v479, 0.0
        %v534 = vmax.f32 %v484, 0.0
        %v535 = vmax.f32 %v489, 0.0
        %v536 = vmax.f32 %v494, 0.0
        %v537 = vmax.f32 %v499, 0.0
        %v538 = vmax.f32 %v504, 0.0
        %v539 = vmax.f32 %v509, 0.0
        %v540 = vmax.f32 %v514, 0.0
        %v541 = vmax.f32 %v519, 0.0
        %v542 = vmax.f32 %v524, 0.0
        %v543 = vld [vmem:[#allocation7] sm:$0xff]
        %v544 = vld [vmem:[#allocation7 + $0x8] sm:$0xff]
        %v545 = vld [vmem:[#allocation7 + $0x10] sm:$0xff]
        %v546 = vld [vmem:[#allocation7 + $0x18] sm:$0xff]
        %v547 = vld [vmem:[#allocation7 + $0x20] sm:$0xff]
        %v548 = vld [vmem:[#allocation7 + $0x28] sm:$0xff]
        %v549 = vld [vmem:[#allocation7 + $0x30] sm:$0xff]
        %v550 = vld [vmem:[#allocation7 + $0x38] sm:$0xff]
        %v551 = vld [vmem:[#allocation7 + $0x40] sm:$0xff]
        %v552 = vld [vmem:[#allocation7 + $0x48] sm:$0xff]
        %v553 = vld [vmem:[#allocation7 + $0x50] sm:$0xff]
        %v554 = vld [vmem:[#allocation7 + $0x58] sm:$0xff]
        %v555 = vld [vmem:[#allocation7 + $0x60] sm:$0xff]
        %v556 = vld [vmem:[#allocation7 + $0x68] sm:$0xff]
        %v557 = vld [vmem:[#allocation7 + $0x70] sm:$0xff]
        %v558 = vld [vmem:[#allocation7 + $0x78] sm:$0xff]
        %v559 = vld [vmem:[%s4] sm:$0x1]
        %v561 = vlaneseq
        %v562 = vshrl.u32 %v561, 7
        %v563 = vsub.s32 0, %v562
        %v564 = vrot.slane %v559, %v563
        %566 = vmatprep.subr.mxu0 0.0
        %567 = vmatpush1.msra.mxu0 %v558
        %568 = vmatprep.subr.mxu0 0.0
        %569 = vmatpush1.msra.mxu0 %v557
        %570 = vmatprep.subr.mxu0 0.0
        %571 = vmatpush1.msra.mxu0 %v556
        %572 = vmatprep.subr.mxu0 0.0
        %573 = vmatpush1.msra.mxu0 %v555
        %574 = vmatprep.subr.mxu0 0.0
        %575 = vmatpush1.msra.mxu0 %v554
        %576 = vmatprep.subr.mxu0 0.0
        %577 = vmatpush1.msra.mxu0 %v553
        %578 = vmatprep.subr.mxu0 0.0
        %579 = vmatpush1.msra.mxu0 %v552
        %580 = vmatprep.subr.mxu0 0.0
        %581 = vmatpush1.msra.mxu0 %v551
        %582 = vmatprep.subr.mxu0 0.0
        %583 = vmatpush1.msra.mxu0 %v550
        %584 = vmatprep.subr.mxu0 0.0
        %585 = vmatpush1.msra.mxu0 %v549
        %586 = vmatprep.subr.mxu0 0.0
        %587 = vmatpush1.msra.mxu0 %v548
        %588 = vmatprep.subr.mxu0 0.0
        %589 = vmatpush1.msra.mxu0 %v547
        %590 = vmatprep.subr.mxu0 0.0
        %591 = vmatpush1.msra.mxu0 %v546
        %592 = vmatprep.subr.mxu0 0.0
        %593 = vmatpush1.msra.mxu0 %v545
        %594 = vmatprep.subr.mxu0 0.0
        %595 = vmatpush1.msra.mxu0 %v544
        %596 = vmatprep.subr.mxu0 0.0
        %597 = vmatpush1.msra.mxu0 %v543
        %598 = vmatprep.subr.mxu0 0.0
        %599 = vmatpush2.msra.mxu0 0.0
        %600 = vmatprep.subr.mxu0 0.0
        %601 = vmatpush2.msra.mxu0 0.0
        %602 = vmatprep.subr.mxu0 0.0
        %603 = vmatpush2.msra.mxu0 0.0
        %604 = vmatprep.subr.mxu0 0.0
        %605 = vmatpush2.msra.mxu0 0.0
        %606 = vmatprep.subr.mxu0 0.0
        %607 = vmatpush2.msra.mxu0 0.0
        %608 = vmatprep.subr.mxu0 0.0
        %609 = vmatpush2.msra.mxu0 0.0
        %610 = vmatprep.subr.mxu0 0.0
        %611 = vmatpush2.msra.mxu0 0.0
        %612 = vmatprep.subr.mxu0 0.0
        %613 = vmatpush2.msra.mxu0 0.0
        %614 = vmatprep.subr.mxu0 0.0
        %615 = vmatpush2.msra.mxu0 0.0
        %616 = vmatprep.subr.mxu0 0.0
        %617 = vmatpush2.msra.mxu0 0.0
        %618 = vmatprep.subr.mxu0 0.0
        %619 = vmatpush2.msra.mxu0 0.0
        %620 = vmatprep.subr.mxu0 0.0
        %621 = vmatpush2.msra.mxu0 0.0
        %622 = vmatprep.subr.mxu0 0.0
        %623 = vmatpush2.msra.mxu0 0.0
        %624 = vmatprep.subr.mxu0 0.0
        %625 = vmatpush2.msra.mxu0 0.0
        %626 = vmatprep.subr.mxu0 0.0
        %627 = vmatpush2.msra.mxu0 0.0
        %628 = vmatprep.subr.mxu0 0.0
        %629 = vmatpush2.msra.mxu0 0.0
        %630 = vmatprep.mubr.f32.mxu0 0.0
        %631 = vmatmul.mubr.f32.gmra.mxu0 %v527
        %v632 = vpop.f32.mrf.mxu0
        %v633 = vadd.f32 %v564, %v632
        %v634 = vpop.f32.mrf.mxu0
        %635 = vmatprep.mubr.f32.mxu0 0.0
        %636 = vmatmul.mubr.f32.gmra.mxu0 %v528
        %v637 = vpop.f32.mrf.mxu0
        %v638 = vadd.f32 %v564, %v637
        %v639 = vpop.f32.mrf.mxu0
        %640 = vmatprep.mubr.f32.mxu0 0.0
        %641 = vmatmul.mubr.f32.gmra.mxu0 %v529
        %v642 = vpop.f32.mrf.mxu0
        %v643 = vadd.f32 %v564, %v642
        %v644 = vpop.f32.mrf.mxu0
        %645 = vmatprep.mubr.f32.mxu0 0.0
        %646 = vmatmul.mubr.f32.gmra.mxu0 %v530
        %v647 = vpop.f32.mrf.mxu0
        %v648 = vadd.f32 %v564, %v647
        %v649 = vpop.f32.mrf.mxu0
        %650 = vmatprep.mubr.f32.mxu0 0.0
        %651 = vmatmul.mubr.f32.gmra.mxu0 %v531
        %v652 = vpop.f32.mrf.mxu0
        %v653 = vadd.f32 %v564, %v652
        %v654 = vpop.f32.mrf.mxu0
        %655 = vmatprep.mubr.f32.mxu0 0.0
        %656 = vmatmul.mubr.f32.gmra.mxu0 %v532
        %v657 = vpop.f32.mrf.mxu0
        %v658 = vadd.f32 %v564, %v657
        %v659 = vpop.f32.mrf.mxu0
        %660 = vmatprep.mubr.f32.mxu0 0.0
        %661 = vmatmul.mubr.f32.gmra.mxu0 %v533
        %v662 = vpop.f32.mrf.mxu0
        %v663 = vadd.f32 %v564, %v662
        %v664 = vpop.f32.mrf.mxu0
        %665 = vmatprep.mubr.f32.mxu0 0.0
        %666 = vmatmul.mubr.f32.gmra.mxu0 %v534
        %v667 = vpop.f32.mrf.mxu0
        %v668 = vadd.f32 %v564, %v667
        %v669 = vpop.f32.mrf.mxu0
        %670 = vmatprep.mubr.f32.mxu0 0.0
        %671 = vmatmul.mubr.f32.gmra.mxu0 %v535
        %v672 = vpop.f32.mrf.mxu0
        %v673 = vadd.f32 %v564, %v672
        %v674 = vpop.f32.mrf.mxu0
        %675 = vmatprep.mubr.f32.mxu0 0.0
        %676 = vmatmul.mubr.f32.gmra.mxu0 %v536
        %v677 = vpop.f32.mrf.mxu0
        %v678 = vadd.f32 %v564, %v677
        %v679 = vpop.f32.mrf.mxu0
        %680 = vmatprep.mubr.f32.mxu0 0.0
        %681 = vmatmul.mubr.f32.gmra.mxu0 %v537
        %v682 = vpop.f32.mrf.mxu0
        %v683 = vadd.f32 %v564, %v682
        %v684 = vpop.f32.mrf.mxu0
        %685 = vmatprep.mubr.f32.mxu0 0.0
        %686 = vmatmul.mubr.f32.gmra.mxu0 %v538
        %v687 = vpop.f32.mrf.mxu0
        %v688 = vadd.f32 %v564, %v687
        %v689 = vpop.f32.mrf.mxu0
        %690 = vmatprep.mubr.f32.mxu0 0.0
        %691 = vmatmul.mubr.f32.gmra.mxu0 %v539
        %v692 = vpop.f32.mrf.mxu0
        %v693 = vadd.f32 %v564, %v692
        %v694 = vpop.f32.mrf.mxu0
        %695 = vmatprep.mubr.f32.mxu0 0.0
        %696 = vmatmul.mubr.f32.gmra.mxu0 %v540
        %v697 = vpop.f32.mrf.mxu0
        %v698 = vadd.f32 %v564, %v697
        %v699 = vpop.f32.mrf.mxu0
        %700 = vmatprep.mubr.f32.mxu0 0.0
        %701 = vmatmul.mubr.f32.gmra.mxu0 %v541
        %v702 = vpop.f32.mrf.mxu0
        %v703 = vadd.f32 %v564, %v702
        %v704 = vpop.f32.mrf.mxu0
        %705 = vmatprep.mubr.f32.mxu0 0.0
        %706 = vmatmul.mubr.f32.gmra.mxu0 %v542
        %v707 = vpop.f32.mrf.mxu0
        %v708 = vadd.f32 %v564, %v707
        %v709 = vpop.f32.mrf.mxu0
        %710 = vdwg.mxu0
        %v711 = vmax.f32 %v633, 0.0
        %v712 = vmax.f32 %v638, 0.0
        %v713 = vmax.f32 %v643, 0.0
        %v714 = vmax.f32 %v648, 0.0
        %v715 = vmax.f32 %v653, 0.0
        %v716 = vmax.f32 %v658, 0.0
        %v717 = vmax.f32 %v663, 0.0
        %v718 = vmax.f32 %v668, 0.0
        %v719 = vmax.f32 %v673, 0.0
        %v720 = vmax.f32 %v678, 0.0
        %v721 = vmax.f32 %v683, 0.0
        %v722 = vmax.f32 %v688, 0.0
        %v723 = vmax.f32 %v693, 0.0
        %v724 = vmax.f32 %v698, 0.0
        %v725 = vmax.f32 %v703, 0.0
        %v726 = vmax.f32 %v708, 0.0
        %s727 = scalar_lea.vmem [#allocation7], 128
        %v728 = vld [vmem:[%s727] sm:$0xff]
        %v729 = vld [vmem:[%s727 + $0x8] sm:$0xff]
        %v730 = vld [vmem:[%s727 + $0x10] sm:$0xff]
        %v731 = vld [vmem:[%s727 + $0x18] sm:$0xff]
        %v732 = vld [vmem:[%s727 + $0x20] sm:$0xff]
        %v733 = vld [vmem:[%s727 + $0x28] sm:$0xff]
        %v734 = vld [vmem:[%s727 + $0x30] sm:$0xff]
        %v735 = vld [vmem:[%s727 + $0x38] sm:$0xff]
        %v736 = vld [vmem:[%s727 + $0x40] sm:$0xff]
        %v737 = vld [vmem:[%s727 + $0x48] sm:$0xff]
        %v738 = vld [vmem:[%s727 + $0x50] sm:$0xff]
        %v739 = vld [vmem:[%s727 + $0x58] sm:$0xff]
        %v740 = vld [vmem:[%s727 + $0x60] sm:$0xff]
        %v741 = vld [vmem:[%s727 + $0x68] sm:$0xff]
        %v742 = vld [vmem:[%s727 + $0x70] sm:$0xff]
        %v743 = vld [vmem:[%s727 + $0x78] sm:$0xff]
        %s744 = scalar_lea.vmem %s4, 1
        %v745 = vld [vmem:[%s744] sm:$0x1]
        %v747 = vlaneseq
        %v748 = vshrl.u32 %v747, 7
        %v749 = vsub.s32 0, %v748
        %v750 = vrot.slane %v745, %v749
        %752 = vmatprep.subr.mxu0 0.0
        %753 = vmatpush1.msra.mxu0 %v743
        %754 = vmatprep.subr.mxu0 0.0
        %755 = vmatpush1.msra.mxu0 %v742
        %756 = vmatprep.subr.mxu0 0.0
        %757 = vmatpush1.msra.mxu0 %v741
        %758 = vmatprep.subr.mxu0 0.0
        %759 = vmatpush1.msra.mxu0 %v740
        %760 = vmatprep.subr.mxu0 0.0
        %761 = vmatpush1.msra.mxu0 %v739
        %762 = vmatprep.subr.mxu0 0.0
        %763 = vmatpush1.msra.mxu0 %v738
        %764 = vmatprep.subr.mxu0 0.0
        %765 = vmatpush1.msra.mxu0 %v737
        %766 = vmatprep.subr.mxu0 0.0
        %767 = vmatpush1.msra.mxu0 %v736
        %768 = vmatprep.subr.mxu0 0.0
        %769 = vmatpush1.msra.mxu0 %v735
        %770 = vmatprep.subr.mxu0 0.0
        %771 = vmatpush1.msra.mxu0 %v734
        %772 = vmatprep.subr.mxu0 0.0
        %773 = vmatpush1.msra.mxu0 %v733
        %774 = vmatprep.subr.mxu0 0.0
        %775 = vmatpush1.msra.mxu0 %v732
        %776 = vmatprep.subr.mxu0 0.0
        %777 = vmatpush1.msra.mxu0 %v731
        %778 = vmatprep.subr.mxu0 0.0
        %779 = vmatpush1.msra.mxu0 %v730
        %780 = vmatprep.subr.mxu0 0.0
        %781 = vmatpush1.msra.mxu0 %v729
        %782 = vmatprep.subr.mxu0 0.0
        %783 = vmatpush1.msra.mxu0 %v728
        %784 = vmatprep.subr.mxu0 0.0
        %785 = vmatpush2.msra.mxu0 0.0
        %786 = vmatprep.subr.mxu0 0.0
        %787 = vmatpush2.msra.mxu0 0.0
        %788 = vmatprep.subr.mxu0 0.0
        %789 = vmatpush2.msra.mxu0 0.0
        %790 = vmatprep.subr.mxu0 0.0
        %791 = vmatpush2.msra.mxu0 0.0
        %792 = vmatprep.subr.mxu0 0.0
        %793 = vmatpush2.msra.mxu0 0.0
        %794 = vmatprep.subr.mxu0 0.0
        %795 = vmatpush2.msra.mxu0 0.0
        %796 = vmatprep.subr.mxu0 0.0
        %797 = vmatpush2.msra.mxu0 0.0
        %798 = vmatprep.subr.mxu0 0.0
        %799 = vmatpush2.msra.mxu0 0.0
        %800 = vmatprep.subr.mxu0 0.0
        %801 = vmatpush2.msra.mxu0 0.0
        %802 = vmatprep.subr.mxu0 0.0
        %803 = vmatpush2.msra.mxu0 0.0
        %804 = vmatprep.subr.mxu0 0.0
        %805 = vmatpush2.msra.mxu0 0.0
        %806 = vmatprep.subr.mxu0 0.0
        %807 = vmatpush2.msra.mxu0 0.0
        %808 = vmatprep.subr.mxu0 0.0
        %809 = vmatpush2.msra.mxu0 0.0
        %810 = vmatprep.subr.mxu0 0.0
        %811 = vmatpush2.msra.mxu0 0.0
        %812 = vmatprep.subr.mxu0 0.0
        %813 = vmatpush2.msra.mxu0 0.0
        %814 = vmatprep.subr.mxu0 0.0
        %815 = vmatpush2.msra.mxu0 0.0
        %816 = vmatprep.mubr.f32.mxu0 0.0
        %817 = vmatmul.mubr.f32.gmra.mxu0 %v711
        %v818 = vpop.f32.mrf.mxu0
        %v819 = vadd.f32 %v750, %v818
        %v820 = vpop.f32.mrf.mxu0
        %821 = vmatprep.mubr.f32.mxu0 0.0
        %822 = vmatmul.mubr.f32.gmra.mxu0 %v712
        %v823 = vpop.f32.mrf.mxu0
        %v824 = vadd.f32 %v750, %v823
        %v825 = vpop.f32.mrf.mxu0
        %826 = vmatprep.mubr.f32.mxu0 0.0
        %827 = vmatmul.mubr.f32.gmra.mxu0 %v713
        %v828 = vpop.f32.mrf.mxu0
        %v829 = vadd.f32 %v750, %v828
        %v830 = vpop.f32.mrf.mxu0
        %831 = vmatprep.mubr.f32.mxu0 0.0
        %832 = vmatmul.mubr.f32.gmra.mxu0 %v714
        %v833 = vpop.f32.mrf.mxu0
        %v834 = vadd.f32 %v750, %v833
        %v835 = vpop.f32.mrf.mxu0
        %836 = vmatprep.mubr.f32.mxu0 0.0
        %837 = vmatmul.mubr.f32.gmra.mxu0 %v715
        %v838 = vpop.f32.mrf.mxu0
        %v839 = vadd.f32 %v750, %v838
        %v840 = vpop.f32.mrf.mxu0
        %841 = vmatprep.mubr.f32.mxu0 0.0
        %842 = vmatmul.mubr.f32.gmra.mxu0 %v716
        %v843 = vpop.f32.mrf.mxu0
        %v844 = vadd.f32 %v750, %v843
        %v845 = vpop.f32.mrf.mxu0
        %846 = vmatprep.mubr.f32.mxu0 0.0
        %847 = vmatmul.mubr.f32.gmra.mxu0 %v717
        %v848 = vpop.f32.mrf.mxu0
        %v849 = vadd.f32 %v750, %v848
        %v850 = vpop.f32.mrf.mxu0
        %851 = vmatprep.mubr.f32.mxu0 0.0
        %852 = vmatmul.mubr.f32.gmra.mxu0 %v718
        %v853 = vpop.f32.mrf.mxu0
        %v854 = vadd.f32 %v750, %v853
        %v855 = vpop.f32.mrf.mxu0
        %856 = vmatprep.mubr.f32.mxu0 0.0
        %857 = vmatmul.mubr.f32.gmra.mxu0 %v719
        %v858 = vpop.f32.mrf.mxu0
        %v859 = vadd.f32 %v750, %v858
        %v860 = vpop.f32.mrf.mxu0
        %861 = vmatprep.mubr.f32.mxu0 0.0
        %862 = vmatmul.mubr.f32.gmra.mxu0 %v720
        %v863 = vpop.f32.mrf.mxu0
        %v864 = vadd.f32 %v750, %v863
        %v865 = vpop.f32.mrf.mxu0
        %866 = vmatprep.mubr.f32.mxu0 0.0
        %867 = vmatmul.mubr.f32.gmra.mxu0 %v721
        %v868 = vpop.f32.mrf.mxu0
        %v869 = vadd.f32 %v750, %v868
        %v870 = vpop.f32.mrf.mxu0
        %871 = vmatprep.mubr.f32.mxu0 0.0
        %872 = vmatmul.mubr.f32.gmra.mxu0 %v722
        %v873 = vpop.f32.mrf.mxu0
        %v874 = vadd.f32 %v750, %v873
        %v875 = vpop.f32.mrf.mxu0
        %876 = vmatprep.mubr.f32.mxu0 0.0
        %877 = vmatmul.mubr.f32.gmra.mxu0 %v723
        %v878 = vpop.f32.mrf.mxu0
        %v879 = vadd.f32 %v750, %v878
        %v880 = vpop.f32.mrf.mxu0
        %881 = vmatprep.mubr.f32.mxu0 0.0
        %882 = vmatmul.mubr.f32.gmra.mxu0 %v724
        %v883 = vpop.f32.mrf.mxu0
        %v884 = vadd.f32 %v750, %v883
        %v885 = vpop.f32.mrf.mxu0
        %886 = vmatprep.mubr.f32.mxu0 0.0
        %887 = vmatmul.mubr.f32.gmra.mxu0 %v725
        %v888 = vpop.f32.mrf.mxu0
        %v889 = vadd.f32 %v750, %v888
        %v890 = vpop.f32.mrf.mxu0
        %891 = vmatprep.mubr.f32.mxu0 0.0
        %892 = vmatmul.mubr.f32.gmra.mxu0 %v726
        %v893 = vpop.f32.mrf.mxu0
        %v894 = vadd.f32 %v750, %v893
        %v895 = vpop.f32.mrf.mxu0
        %896 = vdwg.mxu0
        %v897 = vmax.f32 %v819, 0.0
        %v898 = vmax.f32 %v824, 0.0
        %v899 = vmax.f32 %v829, 0.0
        %v900 = vmax.f32 %v834, 0.0
        %v901 = vmax.f32 %v839, 0.0
        %v902 = vmax.f32 %v844, 0.0
        %v903 = vmax.f32 %v849, 0.0
        %v904 = vmax.f32 %v854, 0.0
        %v905 = vmax.f32 %v859, 0.0
        %v906 = vmax.f32 %v864, 0.0
        %v907 = vmax.f32 %v869, 0.0
        %v908 = vmax.f32 %v874, 0.0
        %v909 = vmax.f32 %v879, 0.0
        %v910 = vmax.f32 %v884, 0.0
        %v911 = vmax.f32 %v889, 0.0
        %v912 = vmax.f32 %v894, 0.0
        %v913 = vld [vmem:[#allocation8] sm:$0xff]
        %v914 = vld [vmem:[#allocation8 + $0x8] sm:$0xff]
        %v915 = vld [vmem:[#allocation8 + $0x10] sm:$0xff]
        %v916 = vld [vmem:[#allocation8 + $0x18] sm:$0xff]
        %v917 = vld [vmem:[#allocation8 + $0x20] sm:$0xff]
        %v918 = vld [vmem:[#allocation8 + $0x28] sm:$0xff]
        %v919 = vld [vmem:[#allocation8 + $0x30] sm:$0xff]
        %v920 = vld [vmem:[#allocation8 + $0x38] sm:$0xff]
        %v921 = vld [vmem:[#allocation8 + $0x40] sm:$0xff]
        %v922 = vld [vmem:[#allocation8 + $0x48] sm:$0xff]
        %v923 = vld [vmem:[#allocation8 + $0x50] sm:$0xff]
        %v924 = vld [vmem:[#allocation8 + $0x58] sm:$0xff]
        %v925 = vld [vmem:[#allocation8 + $0x60] sm:$0xff]
        %v926 = vld [vmem:[#allocation8 + $0x68] sm:$0xff]
        %v927 = vld [vmem:[#allocation8 + $0x70] sm:$0xff]
        %v928 = vld [vmem:[#allocation8 + $0x78] sm:$0xff]
        %v929 = vld [vmem:[%s6] sm:$0x1]
        %v931 = vlaneseq
        %v932 = vshrl.u32 %v931, 7
        %v933 = vsub.s32 0, %v932
        %v934 = vrot.slane %v929, %v933
        %936 = vmatprep.subr.mxu0 0.0
        %937 = vmatpush1.msra.mxu0 %v928
        %938 = vmatprep.subr.mxu0 0.0
        %939 = vmatpush1.msra.mxu0 %v927
        %940 = vmatprep.subr.mxu0 0.0
        %941 = vmatpush1.msra.mxu0 %v926
        %942 = vmatprep.subr.mxu0 0.0
        %943 = vmatpush1.msra.mxu0 %v925
        %944 = vmatprep.subr.mxu0 0.0
        %945 = vmatpush1.msra.mxu0 %v924
        %946 = vmatprep.subr.mxu0 0.0
        %947 = vmatpush1.msra.mxu0 %v923
        %948 = vmatprep.subr.mxu0 0.0
        %949 = vmatpush1.msra.mxu0 %v922
        %950 = vmatprep.subr.mxu0 0.0
        %951 = vmatpush1.msra.mxu0 %v921
        %952 = vmatprep.subr.mxu0 0.0
        %953 = vmatpush1.msra.mxu0 %v920
        %954 = vmatprep.subr.mxu0 0.0
        %955 = vmatpush1.msra.mxu0 %v919
        %956 = vmatprep.subr.mxu0 0.0
        %957 = vmatpush1.msra.mxu0 %v918
        %958 = vmatprep.subr.mxu0 0.0
        %959 = vmatpush1.msra.mxu0 %v917
        %960 = vmatprep.subr.mxu0 0.0
        %961 = vmatpush1.msra.mxu0 %v916
        %962 = vmatprep.subr.mxu0 0.0
        %963 = vmatpush1.msra.mxu0 %v915
        %964 = vmatprep.subr.mxu0 0.0
        %965 = vmatpush1.msra.mxu0 %v914
        %966 = vmatprep.subr.mxu0 0.0
        %967 = vmatpush1.msra.mxu0 %v913
        %968 = vmatprep.subr.mxu0 0.0
        %969 = vmatpush2.msra.mxu0 0.0
        %970 = vmatprep.subr.mxu0 0.0
        %971 = vmatpush2.msra.mxu0 0.0
        %972 = vmatprep.subr.mxu0 0.0
        %973 = vmatpush2.msra.mxu0 0.0
        %974 = vmatprep.subr.mxu0 0.0
        %975 = vmatpush2.msra.mxu0 0.0
        %976 = vmatprep.subr.mxu0 0.0
        %977 = vmatpush2.msra.mxu0 0.0
        %978 = vmatprep.subr.mxu0 0.0
        %979 = vmatpush2.msra.mxu0 0.0
        %980 = vmatprep.subr.mxu0 0.0
        %981 = vmatpush2.msra.mxu0 0.0
        %982 = vmatprep.subr.mxu0 0.0
        %983 = vmatpush2.msra.mxu0 0.0
        %984 = vmatprep.subr.mxu0 0.0
        %985 = vmatpush2.msra.mxu0 0.0
        %986 = vmatprep.subr.mxu0 0.0
        %987 = vmatpush2.msra.mxu0 0.0
        %988 = vmatprep.subr.mxu0 0.0
        %989 = vmatpush2.msra.mxu0 0.0
        %990 = vmatprep.subr.mxu0 0.0
        %991 = vmatpush2.msra.mxu0 0.0
        %992 = vmatprep.subr.mxu0 0.0
        %993 = vmatpush2.msra.mxu0 0.0
        %994 = vmatprep.subr.mxu0 0.0
        %995 = vmatpush2.msra.mxu0 0.0
        %996 = vmatprep.subr.mxu0 0.0
        %997 = vmatpush2.msra.mxu0 0.0
        %998 = vmatprep.subr.mxu0 0.0
        %999 = vmatpush2.msra.mxu0 0.0
        %1000 = vmatprep.mubr.f32.mxu0 0.0
        %1001 = vmatmul.mubr.f32.gmra.mxu0 %v897
        %v1002 = vpop.f32.mrf.mxu0
        %v1003 = vadd.f32 %v934, %v1002
        %v1004 = vpop.f32.mrf.mxu0
        %1005 = vmatprep.mubr.f32.mxu0 0.0
        %1006 = vmatmul.mubr.f32.gmra.mxu0 %v898
        %v1007 = vpop.f32.mrf.mxu0
        %v1008 = vadd.f32 %v934, %v1007
        %v1009 = vpop.f32.mrf.mxu0
        %1010 = vmatprep.mubr.f32.mxu0 0.0
        %1011 = vmatmul.mubr.f32.gmra.mxu0 %v899
        %v1012 = vpop.f32.mrf.mxu0
        %v1013 = vadd.f32 %v934, %v1012
        %v1014 = vpop.f32.mrf.mxu0
        %1015 = vmatprep.mubr.f32.mxu0 0.0
        %1016 = vmatmul.mubr.f32.gmra.mxu0 %v900
        %v1017 = vpop.f32.mrf.mxu0
        %v1018 = vadd.f32 %v934, %v1017
        %v1019 = vpop.f32.mrf.mxu0
        %1020 = vmatprep.mubr.f32.mxu0 0.0
        %1021 = vmatmul.mubr.f32.gmra.mxu0 %v901
        %v1022 = vpop.f32.mrf.mxu0
        %v1023 = vadd.f32 %v934, %v1022
        %v1024 = vpop.f32.mrf.mxu0
        %1025 = vmatprep.mubr.f32.mxu0 0.0
        %1026 = vmatmul.mubr.f32.gmra.mxu0 %v902
        %v1027 = vpop.f32.mrf.mxu0
        %v1028 = vadd.f32 %v934, %v1027
        %v1029 = vpop.f32.mrf.mxu0
        %1030 = vmatprep.mubr.f32.mxu0 0.0
        %1031 = vmatmul.mubr.f32.gmra.mxu0 %v903
        %v1032 = vpop.f32.mrf.mxu0
        %v1033 = vadd.f32 %v934, %v1032
        %v1034 = vpop.f32.mrf.mxu0
        %1035 = vmatprep.mubr.f32.mxu0 0.0
        %1036 = vmatmul.mubr.f32.gmra.mxu0 %v904
        %v1037 = vpop.f32.mrf.mxu0
        %v1038 = vadd.f32 %v934, %v1037
        %v1039 = vpop.f32.mrf.mxu0
        %1040 = vmatprep.mubr.f32.mxu0 0.0
        %1041 = vmatmul.mubr.f32.gmra.mxu0 %v905
        %v1042 = vpop.f32.mrf.mxu0
        %v1043 = vadd.f32 %v934, %v1042
        %v1044 = vpop.f32.mrf.mxu0
        %1045 = vmatprep.mubr.f32.mxu0 0.0
        %1046 = vmatmul.mubr.f32.gmra.mxu0 %v906
        %v1047 = vpop.f32.mrf.mxu0
        %v1048 = vadd.f32 %v934, %v1047
        %v1049 = vpop.f32.mrf.mxu0
        %1050 = vmatprep.mubr.f32.mxu0 0.0
        %1051 = vmatmul.mubr.f32.gmra.mxu0 %v907
        %v1052 = vpop.f32.mrf.mxu0
        %v1053 = vadd.f32 %v934, %v1052
        %v1054 = vpop.f32.mrf.mxu0
        %1055 = vmatprep.mubr.f32.mxu0 0.0
        %1056 = vmatmul.mubr.f32.gmra.mxu0 %v908
        %v1057 = vpop.f32.mrf.mxu0
        %v1058 = vadd.f32 %v934, %v1057
        %v1059 = vpop.f32.mrf.mxu0
        %1060 = vmatprep.mubr.f32.mxu0 0.0
        %1061 = vmatmul.mubr.f32.gmra.mxu0 %v909
        %v1062 = vpop.f32.mrf.mxu0
        %v1063 = vadd.f32 %v934, %v1062
        %v1064 = vpop.f32.mrf.mxu0
        %1065 = vmatprep.mubr.f32.mxu0 0.0
        %1066 = vmatmul.mubr.f32.gmra.mxu0 %v910
        %v1067 = vpop.f32.mrf.mxu0
        %v1068 = vadd.f32 %v934, %v1067
        %v1069 = vpop.f32.mrf.mxu0
        %1070 = vmatprep.mubr.f32.mxu0 0.0
        %1071 = vmatmul.mubr.f32.gmra.mxu0 %v911
        %v1072 = vpop.f32.mrf.mxu0
        %v1073 = vadd.f32 %v934, %v1072
        %v1074 = vpop.f32.mrf.mxu0
        %1075 = vmatprep.mubr.f32.mxu0 0.0
        %1076 = vmatmul.mubr.f32.gmra.mxu0 %v912
        %v1077 = vpop.f32.mrf.mxu0
        %v1078 = vadd.f32 %v934, %v1077
        %v1079 = vpop.f32.mrf.mxu0
        %1080 = vdwg.mxu0
        %v1081 = vlaneseq
        %v1082 = vand.u32 %v1081, 127
        %vm1083 = vcmp.lt.s32.totalorder %v1082, 2
        %v1084 = vsel %vm1083, %v1003, -3.4028235e+38
        %v1085 = vsel %vm1083, %v1008, -3.4028235e+38
        %v1086 = vsel %vm1083, %v1013, -3.4028235e+38
        %v1087 = vsel %vm1083, %v1018, -3.4028235e+38
        %v1088 = vsel %vm1083, %v1023, -3.4028235e+38
        %v1089 = vsel %vm1083, %v1028, -3.4028235e+38
        %v1090 = vsel %vm1083, %v1033, -3.4028235e+38
        %v1091 = vsel %vm1083, %v1038, -3.4028235e+38
        %v1092 = vsel %vm1083, %v1043, -3.4028235e+38
        %v1093 = vsel %vm1083, %v1048, -3.4028235e+38
        %v1094 = vsel %vm1083, %v1053, -3.4028235e+38
        %v1095 = vsel %vm1083, %v1058, -3.4028235e+38
        %v1096 = vsel %vm1083, %v1063, -3.4028235e+38
        %v1097 = vsel %vm1083, %v1068, -3.4028235e+38
        %v1098 = vsel %vm1083, %v1073, -3.4028235e+38
        %v1099 = vsel %vm1083, %v1078, -3.4028235e+38
        %1100 = vmax.xlane.f32.xlu0 %v1084
        %v1101 = vpop.xlane.xlu0 %1100
        %1102 = vmax.xlane.f32.xlu0 %v1085
        %v1103 = vpop.xlane.xlu0 %1102
        %1104 = vmax.xlane.f32.xlu0 %v1086
        %v1105 = vpop.xlane.xlu0 %1104
        %1106 = vmax.xlane.f32.xlu0 %v1087
        %v1107 = vpop.xlane.xlu0 %1106
        %1108 = vmax.xlane.f32.xlu0 %v1088
        %v1109 = vpop.xlane.xlu0 %1108
        %1110 = vmax.xlane.f32.xlu0 %v1089
        %v1111 = vpop.xlane.xlu0 %1110
        %1112 = vmax.xlane.f32.xlu0 %v1090
        %v1113 = vpop.xlane.xlu0 %1112
        %1114 = vmax.xlane.f32.xlu0 %v1091
        %v1115 = vpop.xlane.xlu0 %1114
        %1116 = vmax.xlane.f32.xlu0 %v1092
        %v1117 = vpop.xlane.xlu0 %1116
        %1118 = vmax.xlane.f32.xlu0 %v1093
        %v1119 = vpop.xlane.xlu0 %1118
        %1120 = vmax.xlane.f32.xlu0 %v1094
        %v1121 = vpop.xlane.xlu0 %1120
        %1122 = vmax.xlane.f32.xlu0 %v1095
        %v1123 = vpop.xlane.xlu0 %1122
        %1124 = vmax.xlane.f32.xlu0 %v1096
        %v1125 = vpop.xlane.xlu0 %1124
        %1126 = vmax.xlane.f32.xlu0 %v1097
        %v1127 = vpop.xlane.xlu0 %1126
        %1128 = vmax.xlane.f32.xlu0 %v1098
        %v1129 = vpop.xlane.xlu0 %1128
        %1130 = vmax.xlane.f32.xlu0 %v1099
        %v1131 = vpop.xlane.xlu0 %1130
        %v1132 = vsub.f32 %v1084, %v1101
        %v1133 = vsub.f32 %v1085, %v1103
        %v1134 = vsub.f32 %v1086, %v1105
        %v1135 = vsub.f32 %v1087, %v1107
        %v1136 = vsub.f32 %v1088, %v1109
        %v1137 = vsub.f32 %v1089, %v1111
        %v1138 = vsub.f32 %v1090, %v1113
        %v1139 = vsub.f32 %v1091, %v1115
        %v1140 = vsub.f32 %v1092, %v1117
        %v1141 = vsub.f32 %v1093, %v1119
        %v1142 = vsub.f32 %v1094, %v1121
        %v1143 = vsub.f32 %v1095, %v1123
        %v1144 = vsub.f32 %v1096, %v1125
        %v1145 = vsub.f32 %v1097, %v1127
        %v1146 = vsub.f32 %v1098, %v1129
        %v1147 = vsub.f32 %v1099, %v1131
        %v1148 = vmul.f32 %v1132, 1.442695
        %v1149 = vpow.pop %v1148
        %v1150 = vmul.f32 %v1133, 1.442695
        %v1151 = vpow.pop %v1150
        %v1152 = vmul.f32 %v1134, 1.442695
        %v1153 = vpow.pop %v1152
        %v1154 = vmul.f32 %v1135, 1.442695
        %v1155 = vpow.pop %v1154
        %v1156 = vmul.f32 %v1136, 1.442695
        %v1157 = vpow.pop %v1156
        %v1158 = vmul.f32 %v1137, 1.442695
        %v1159 = vpow.pop %v1158
        %v1160 = vmul.f32 %v1138, 1.442695
        %v1161 = vpow.pop %v1160
        %v1162 = vmul.f32 %v1139, 1.442695
        %v1163 = vpow.pop %v1162
        %v1164 = vmul.f32 %v1140, 1.442695
        %v1165 = vpow.pop %v1164
        %v1166 = vmul.f32 %v1141, 1.442695
        %v1167 = vpow.pop %v1166
        %v1168 = vmul.f32 %v1142, 1.442695
        %v1169 = vpow.pop %v1168
        %v1170 = vmul.f32 %v1143, 1.442695
        %v1171 = vpow.pop %v1170
        %v1172 = vmul.f32 %v1144, 1.442695
        %v1173 = vpow.pop %v1172
        %v1174 = vmul.f32 %v1145, 1.442695
        %v1175 = vpow.pop %v1174
        %v1176 = vmul.f32 %v1146, 1.442695
        %v1177 = vpow.pop %v1176
        %v1178 = vmul.f32 %v1147, 1.442695
        %v1179 = vpow.pop %v1178
        %1180 = vadd.xlane.f32.xlu0 %v1149
        %v1181 = vpop.xlane.xlu0 %1180
        %1182 = vadd.xlane.f32.xlu0 %v1151
        %v1183 = vpop.xlane.xlu0 %1182
        %1184 = vadd.xlane.f32.xlu0 %v1153
        %v1185 = vpop.xlane.xlu0 %1184
        %1186 = vadd.xlane.f32.xlu0 %v1155
        %v1187 = vpop.xlane.xlu0 %1186
        %1188 = vadd.xlane.f32.xlu0 %v1157
        %v1189 = vpop.xlane.xlu0 %1188
        %1190 = vadd.xlane.f32.xlu0 %v1159
        %v1191 = vpop.xlane.xlu0 %1190
        %1192 = vadd.xlane.f32.xlu0 %v1161
        %v1193 = vpop.xlane.xlu0 %1192
        %1194 = vadd.xlane.f32.xlu0 %v1163
        %v1195 = vpop.xlane.xlu0 %1194
        %1196 = vadd.xlane.f32.xlu0 %v1165
        %v1197 = vpop.xlane.xlu0 %1196
        %1198 = vadd.xlane.f32.xlu0 %v1167
        %v1199 = vpop.xlane.xlu0 %1198
        %1200 = vadd.xlane.f32.xlu0 %v1169
        %v1201 = vpop.xlane.xlu0 %1200
        %1202 = vadd.xlane.f32.xlu0 %v1171
        %v1203 = vpop.xlane.xlu0 %1202
        %1204 = vadd.xlane.f32.xlu0 %v1173
        %v1205 = vpop.xlane.xlu0 %1204
        %1206 = vadd.xlane.f32.xlu0 %v1175
        %v1207 = vpop.xlane.xlu0 %1206
        %1208 = vadd.xlane.f32.xlu0 %v1177
        %v1209 = vpop.xlane.xlu0 %1208
        %1210 = vadd.xlane.f32.xlu0 %v1179
        %v1211 = vpop.xlane.xlu0 %1210
        %v1212 = vrcp.pop %v1181
        %v1213 = vmul.f32 %v1149, %v1212
        %v1214 = vrcp.pop %v1183
        %v1215 = vmul.f32 %v1151, %v1214
        %v1216 = vrcp.pop %v1185
        %v1217 = vmul.f32 %v1153, %v1216
        %v1218 = vrcp.pop %v1187
        %v1219 = vmul.f32 %v1155, %v1218
        %v1220 = vrcp.pop %v1189
        %v1221 = vmul.f32 %v1157, %v1220
        %v1222 = vrcp.pop %v1191
        %v1223 = vmul.f32 %v1159, %v1222
        %v1224 = vrcp.pop %v1193
        %v1225 = vmul.f32 %v1161, %v1224
        %v1226 = vrcp.pop %v1195
        %v1227 = vmul.f32 %v1163, %v1226
        %v1228 = vrcp.pop %v1197
        %v1229 = vmul.f32 %v1165, %v1228
        %v1230 = vrcp.pop %v1199
        %v1231 = vmul.f32 %v1167, %v1230
        %v1232 = vrcp.pop %v1201
        %v1233 = vmul.f32 %v1169, %v1232
        %v1234 = vrcp.pop %v1203
        %v1235 = vmul.f32 %v1171, %v1234
        %v1236 = vrcp.pop %v1205
        %v1237 = vmul.f32 %v1173, %v1236
        %v1238 = vrcp.pop %v1207
        %v1239 = vmul.f32 %v1175, %v1238
        %v1240 = vrcp.pop %v1209
        %v1241 = vmul.f32 %v1177, %v1240
        %v1242 = vrcp.pop %v1211
        %v1243 = vmul.f32 %v1179, %v1242
        %1244 = vst [vmem:[%s340] sm:$0xff] %v1213
        %1245 = vst [vmem:[%s340 + $0x8] sm:$0xff] %v1215
        %1246 = vst [vmem:[%s340 + $0x10] sm:$0xff] %v1217
        %1247 = vst [vmem:[%s340 + $0x18] sm:$0xff] %v1219
        %1248 = vst [vmem:[%s340 + $0x20] sm:$0xff] %v1221
        %1249 = vst [vmem:[%s340 + $0x28] sm:$0xff] %v1223
        %1250 = vst [vmem:[%s340 + $0x30] sm:$0xff] %v1225
        %1251 = vst [vmem:[%s340 + $0x38] sm:$0xff] %v1227
        %1252 = vst [vmem:[%s340 + $0x40] sm:$0xff] %v1229
        %1253 = vst [vmem:[%s340 + $0x48] sm:$0xff] %v1231
        %1254 = vst [vmem:[%s340 + $0x50] sm:$0xff] %v1233
        %1255 = vst [vmem:[%s340 + $0x58] sm:$0xff] %v1235
        %1256 = vst [vmem:[%s340 + $0x60] sm:$0xff] %v1237
        %1257 = vst [vmem:[%s340 + $0x68] sm:$0xff] %v1239
        %1258 = vst [vmem:[%s340 + $0x70] sm:$0xff] %v1241
        %1259 = vst [vmem:[%s340 + $0x78] sm:$0xff] %v1243
        %s1260 = sand.u32 %s186, 1
        %s1261 = scalar_lea.sflag [#allocation4], %s1260
        %s1262 = sand.u32 %s186, 1
        %s1263 = smul.addr %s1262, 128
        %s1264 = scalar_lea.vmem [#allocation10], %s1263
        // Predicated region
        $region65: #{tpu_custom_call.1} parent=47 // pred_check
          %p1265 = pneg %p196
        $region66: #{tpu_custom_call.1} parent=47 // pred_check_branch
          %1267 = sbr.rel (%p1265) target = $region68
        $region67: #{tpu_custom_call.1} parent=47 // pred_region
          %s1268 = smul.u32 16, %s26
          %s1270 = ssub.s32 2048, 2048
          %1271 = vsyncadd %s1261, %s1270
          %s1272 = smul.addr %s1268, 128
          %s1273 = scalar_lea.hbm %s7, %s1272
          %s1274 = sshll.u32 %s1264, 4
          %s1275 = int_to_ptr.vmem [resolvable:$true] %s1274
          %1280 = dma.vmem_to_hbm [thread:$0]  %s1275, 2048, %s1273, %s1261, 128, 128, 8
        $region68: #{tpu_custom_call.1} parent=47 // pred_fallthru
          _
      $region48: #{tpu_custom_call.1} parent=5 // pred_fallthru
        _
      %p1281 = scmp.le.s32.totalorder 2, %s21
      // Predicated region
      $region69: #{tpu_custom_call.1} parent=5 // pred_check
        %p1282 = pneg %p1281
      $region70: #{tpu_custom_call.1} parent=5 // pred_check_branch
        %1284 = sbr.rel (%p1282) target = $region72
      $region71: #{tpu_custom_call.1} parent=5 // pred_region
        %s1285 = ssub.s32 %s21, 2
        // Predicated region
        $region73: #{tpu_custom_call.1} parent=71 // pred_check
          %p1286 = pneg %p202
        $region74: #{tpu_custom_call.1} parent=71 // pred_check_branch
          %1288 = sbr.rel (%p1286) target = $region76
        $region75: #{tpu_custom_call.1} parent=71 // pred_region
          %s1289 = sand.u32 %s187, 1
          %s1290 = scalar_lea.sflag [#allocation4], %s1289
          %s1291 = sand.u32 %s187, 1
          %s1292 = smul.addr %s1291, 128
          %s1293 = scalar_lea.vmem [#allocation10], %s1292
          %1294 = dma.done %s1290, 2048
        $region76: #{tpu_custom_call.1} parent=71 // pred_fallthru
          _
      $region72: #{tpu_custom_call.1} parent=5 // pred_fallthru
        _
    $region6: #{tpu_custom_call.1} parent=1 // loop_footer
      %s25 = sadd.s32 1, %s21
    $region7: #{tpu_custom_call.1} parent=1 // loop_footer_branch
      %20 = sbr.rel target = $region3
    $region8: #{tpu_custom_call.1} parent=1 // loop_exit
      _
    %1295 = vsyncpa [#allocation3], 1
    %s1296 = scalar_lea.sflag [#allocation3], 1
    %1297 = vsyncpa %s1296, 1
    %1298 = vsyncpa [#allocation6], 1
    %1299 = vsyncpa [#allocation9], 1
    %1300 = vsyncpa [#allocation4], 1
    %s1301 = scalar_lea.sflag [#allocation4], 1
    %1302 = vsyncpa %s1301, 1

// kernel: tpu_custom_call.1
$region0: #{tpu_custom_call.1}
  #allocation0 [shape = 'u32[]', space=smem, size = 0x4, offset = 0x4, fixed_abs, tag = 'smem constant byte address 0x4 - core index']
  #allocation1 [shape = 'u32[144,128]{1,0:T(1,128)}', space=vmem, size = 0x12000, scoped, tag = 'internal scratch']
  %s0 = inlined_call_operand.hbm [shape: f32[256,128], index: 0, kind: input, shape index: {}]
  %s1 = inlined_call_operand.hbm [shape: f32[128,128], index: 1, kind: input, shape index: {}]
  %s2 = inlined_call_operand.vmem [shape: f32[1,128], index: 2, kind: input, shape index: {}]
  %s3 = inlined_call_operand.hbm [shape: f32[2,128,128], index: 3, kind: input, shape index: {}]
  %s4 = inlined_call_operand.vmem [shape: f32[2,1,128], index: 4, kind: input, shape index: {}]
  %s5 = inlined_call_operand.hbm [shape: f32[128,128], index: 5, kind: input, shape index: {}]
  %s6 = inlined_call_operand.vmem [shape: f32[1,128], index: 6, kind: input, shape index: {}]
  %s7 = inlined_call_operand.hbm [shape: f32[256,128], index: 7, kind: output, shape index: {}]
  %s8 = sld [smem:[#allocation0]]
  $region77: #{tpu_custom_call.1} parent=0
    _
  %s10 = ssub.s32 1, %s8
  %s11 = scalar_select 0, %s10, %s8
  $region1: #{tpu_custom_call.1} parent=0
    #allocation2 [shape = 'u8[131072]{0}', space=vmem, size = 0x20000, scoped, tag = 'input window, operand 0']
    #allocation3 [shape = 's32[2]{0}', space=sflag, size = 0x8, scoped, tag = 'scoped memory for tpu_custom_call.1']
    #allocation4 [shape = 's32[2]{0}', space=sflag, size = 0x8, scoped, tag = 'scoped memory for tpu_custom_call.1']
    #allocation5 [shape = 'u8[65536]{0}', space=vmem, size = 0x10000, scoped, tag = 'input window, operand 1, single buffered']
    #allocation6 [shape = 's32[1]{0}', space=sflag, size = 0x4, scoped, tag = 'scoped memory for tpu_custom_call.1']
    #allocation7 [shape = 'u8[131072]{0}', space=vmem, size = 0x20000, scoped, tag = 'input window, operand 3, single buffered']
    #allocation8 [shape = 'u8[65536]{0}', space=vmem, size = 0x10000, scoped, tag = 'input window, operand 5, single buffered']
    #allocation9 [shape = 's32[1]{0}', space=sflag, size = 0x4, scoped, tag = 'scoped memory for tpu_custom_call.1']
    #allocation10 [shape = 'u8[131072]{0}', space=vmem, size = 0x20000, scoped, tag = 'output window, operand 0']
    %12 = vsyncpa [#allocation3], 0
    %s13 = scalar_lea.sflag [#allocation3], 1
    %14 = vsyncpa %s13, 0
    %15 = vsyncpa [#allocation6], 0
    %16 = vsyncpa [#allocation9], 0
    %17 = vsyncpa [#allocation4], 0
    %s18 = scalar_lea.sflag [#allocation4], 1
    %19 = vsyncpa %s18, 0
    loop: start=0, step=1, limit=4
    $region2: #{tpu_custom_call.1} parent=1 // loop_pre_header
      _
    $region3: #{tpu_custom_call.1} parent=1 // loop_header
      %s21 = sphi 0, %s25
      %p22 = scmp.ge.s32.totalorder %s21, 4
      %s31 = sphi 0, %s33
      %s34 = sphi 0, %s31
      %s35 = sphi 0, %s34
      %s51 = sphi 0, %s35
      %s55 = sphi 0, %s55
      %s57 = sphi 0, %s55
      %s58 = sphi 0, %s57
      %s72 = sphi 0, %s58
      %s76 = sphi 0, %s76
      %s78 = sphi 0, %s76
      %s79 = sphi 0, %s78
      %s93 = sphi 0, %s79
      %s97 = sphi 0, %s97
      %s99 = sphi 0, %s97
      %s100 = sphi 0, %s99
      %s114 = sphi 0, %s100
      %s118 = sphi 0, %s118
      %s120 = sphi 0, %s118
      %s121 = sphi 0, %s120
      %s135 = sphi 0, %s121
      %s139 = sphi 0, %s139
      %s141 = sphi 0, %s139
      %s142 = sphi 0, %s141
      %s156 = sphi 0, %s142
      %s160 = sphi 0, %s160
      %s162 = sphi 0, %s160
      %s163 = sphi 0, %s162
      %s177 = sphi 0, %s163
      %s183 = sphi 0, %s185
      %s186 = sphi 0, %s183
      %s187 = sphi 0, %s186
      %s203 = sphi 0, %s187
    $region4: #{tpu_custom_call.1} parent=1 // loop_header_branch
      %24 = sbr.rel (%p22) target = $region8
    $region5: #{tpu_custom_call.1} parent=1 // loop_body
      %s26 = ssub.s32 %s21, 1
      %s27 = ssub.s32 %s21, 2
      %s28 = sadd.s32 %s21, 1
      %s29 = ssub.s32 %s21, %s28
      %p30 = scmp.eq.s32.totalorder %s29, 0
      %s32 = sadd.s32 %s31, 1
      %s33 = scalar_select %p30, %s31, %s32
      %p36 = pneg %p30
      %p37 = scmp.eq.s32.totalorder %s21, 1
      %p38 = por %p36, %p37
      %p39 = scmp.ne.s32.totalorder %s31, %s34
      %p40 = scmp.eq.s32.totalorder %s21, 0
      %p41 = por %p39, %p40
      %p42 = scmp.ne.s32.totalorder %s31, %s34
      %p43 = scmp.eq.s32.totalorder %s26, 1
      %p44 = por %p42, %p43
      %p45 = scmp.ne.s32.totalorder %s34, %s35
      %p46 = scmp.eq.s32.totalorder %s26, 0
      %p47 = por %p45, %p46
      %p48 = scmp.ne.s32.totalorder %s34, %s35
      %p49 = scmp.eq.s32.totalorder %s27, 1
      %p50 = por %p48, %p49
      %p52 = scmp.ne.s32.totalorder %s35, %s51
      %p53 = scmp.eq.s32.totalorder %s27, 0
      %p54 = por %p52, %p53
      %s56 = sadd.s32 %s55, 1
      %p59 = scmp.eq.s32.totalorder %s21, 1
      %p60 = scmp.ne.s32.totalorder %s55, %s57
      %p61 = scmp.eq.s32.totalorder %s21, 0
      %p62 = por %p60, %p61
      %p63 = scmp.ne.s32.totalorder %s55, %s57
      %p64 = scmp.eq.s32.totalorder %s26, 1
      %p65 = por %p63, %p64
      %p66 = scmp.ne.s32.totalorder %s57, %s58
      %p67 = scmp.eq.s32.totalorder %s26, 0
      %p68 = por %p66, %p67
      %p69 = scmp.ne.s32.totalorder %s57, %s58
      %p70 = scmp.eq.s32.totalorder %s27, 1
      %p71 = por %p69, %p70
      %p73 = scmp.ne.s32.totalorder %s58, %s72
      %p74 = scmp.eq.s32.totalorder %s27, 0
      %p75 = por %p73, %p74
      %s77 = sadd.s32 %s76, 1
      %p80 = scmp.eq.s32.totalorder %s21, 1
      %p81 = scmp.ne.s32.totalorder %s76, %s78
      %p82 = scmp.eq.s32.totalorder %s21, 0
      %p83 = por %p81, %p82
      %p84 = scmp.ne.s32.totalorder %s76, %s78
      %p85 = scmp.eq.s32.totalorder %s26, 1
      %p86 = por %p84, %p85
      %p87 = scmp.ne.s32.totalorder %s78, %s79
      %p88 = scmp.eq.s32.totalorder %s26, 0
      %p89 = por %p87, %p88
      %p90 = scmp.ne.s32.totalorder %s78, %s79
      %p91 = scmp.eq.s32.totalorder %s27, 1
      %p92 = por %p90, %p91
      %p94 = scmp.ne.s32.totalorder %s79, %s93
      %p95 = scmp.eq.s32.totalorder %s27, 0
      %p96 = por %p94, %p95
      %s98 = sadd.s32 %s97, 1
      %p101 = scmp.eq.s32.totalorder %s21, 1
      %p102 = scmp.ne.s32.totalorder %s97, %s99
      %p103 = scmp.eq.s32.totalorder %s21, 0
      %p104 = por %p102, %p103
      %p105 = scmp.ne.s32.totalorder %s97, %s99
      %p106 = scmp.eq.s32.totalorder %s26, 1
      %p107 = por %p105, %p106
      %p108 = scmp.ne.s32.totalorder %s99, %s100
      %p109 = scmp.eq.s32.totalorder %s26, 0
      %p110 = por %p108, %p109
      %p111 = scmp.ne.s32.totalorder %s99, %s100
      %p112 = scmp.eq.s32.totalorder %s27, 1
      %p113 = por %p111, %p112
      %p115 = scmp.ne.s32.totalorder %s100, %s114
      %p116 = scmp.eq.s32.totalorder %s27, 0
      %p117 = por %p115, %p116
      %s119 = sadd.s32 %s118, 1
      %p122 = scmp.eq.s32.totalorder %s21, 1
      %p123 = scmp.ne.s32.totalorder %s118, %s120
      %p124 = scmp.eq.s32.totalorder %s21, 0
      %p125 = por %p123, %p124
      %p126 = scmp.ne.s32.totalorder %s118, %s120
      %p127 = scmp.eq.s32.totalorder %s26, 1
      %p128 = por %p126, %p127
      %p129 = scmp.ne.s32.totalorder %s120, %s121
      %p130 = scmp.eq.s32.totalorder %s26, 0
      %p131 = por %p129, %p130
      %p132 = scmp.ne.s32.totalorder %s120, %s121
      %p133 = scmp.eq.s32.totalorder %s27, 1
      %p134 = por %p132, %p133
      %p136 = scmp.ne.s32.totalorder %s121, %s135
      %p137 = scmp.eq.s32.totalorder %s27, 0
      %p138 = por %p136, %p137
      %s140 = sadd.s32 %s139, 1
      %p143 = scmp.eq.s32.totalorder %s21, 1
      %p144 = scmp.ne.s32.totalorder %s139, %s141
      %p145 = scmp.eq.s32.totalorder %s21, 0
      %p146 = por %p144, %p145
      %p147 = scmp.ne.s32.totalorder %s139, %s141
      %p148 = scmp.eq.s32.totalorder %s26, 1
      %p149 = por %p147, %p148
      %p150 = scmp.ne.s32.totalorder %s141, %s142
      %p151 = scmp.eq.s32.totalorder %s26, 0
      %p152 = por %p150, %p151
      %p153 = scmp.ne.s32.totalorder %s141, %s142
      %p154 = scmp.eq.s32.totalorder %s27, 1
      %p155 = por %p153, %p154
      %p157 = scmp.ne.s32.totalorder %s142, %s156
      %p158 = scmp.eq.s32.totalorder %s27, 0
      %p159 = por %p157, %p158
      %s161 = sadd.s32 %s160, 1
      %p164 = scmp.eq.s32.totalorder %s21, 1
      %p165 = scmp.ne.s32.totalorder %s160, %s162
      %p166 = scmp.eq.s32.totalorder %s21, 0
      %p167 = por %p165, %p166
      %p168 = scmp.ne.s32.totalorder %s160, %s162
      %p169 = scmp.eq.s32.totalorder %s26, 1
      %p170 = por %p168, %p169
      %p171 = scmp.ne.s32.totalorder %s162, %s163
      %p172 = scmp.eq.s32.totalorder %s26, 0
      %p173 = por %p171, %p172
      %p174 = scmp.ne.s32.totalorder %s162, %s163
      %p175 = scmp.eq.s32.totalorder %s27, 1
      %p176 = por %p174, %p175
      %p178 = scmp.ne.s32.totalorder %s163, %s177
      %p179 = scmp.eq.s32.totalorder %s27, 0
      %p180 = por %p178, %p179
      %s181 = ssub.s32 %s21, %s28
      %p182 = scmp.eq.s32.totalorder %s181, 0
      %s184 = sadd.s32 %s183, 1
      %s185 = scalar_select %p182, %s183, %s184
      %p188 = pneg %p182
      %p189 = scmp.eq.s32.totalorder %s21, 1
      %p190 = por %p188, %p189
      %p191 = scmp.ne.s32.totalorder %s183, %s186
      %p192 = scmp.eq.s32.totalorder %s21, 0
      %p193 = por %p191, %p192
      %p194 = scmp.ne.s32.totalorder %s183, %s186
      %p195 = scmp.eq.s32.totalorder %s26, 1
      %p196 = por %p194, %p195
      %p197 = scmp.ne.s32.totalorder %s186, %s187
      %p198 = scmp.eq.s32.totalorder %s26, 0
      %p199 = por %p197, %p198
      %p200 = scmp.ne.s32.totalorder %s186, %s187
      %p201 = scmp.eq.s32.totalorder %s27, 1
      %p202 = por %p200, %p201
      %p204 = scmp.ne.s32.totalorder %s187, %s203
      %p205 = scmp.eq.s32.totalorder %s27, 0
      %p206 = por %p204, %p205
      %p207 = scmp.le.s32.totalorder 1, %s21
      %p208 = scmp.lt.s32.totalorder %s21, 3
      %p209 = pnand %p207, %p208
      %p210 = pneg %p209
      // Predicated region
      $region9: #{tpu_custom_call.1} parent=5 // pred_check
        _
      $region10: #{tpu_custom_call.1} parent=5 // pred_check_branch
        %212 = sbr.rel (%p209) target = $region12
      $region11: #{tpu_custom_call.1} parent=5 // pred_region
        %s213 = ssub.s32 %s21, 1
        // Predicated region
        $region13: #{tpu_custom_call.1} parent=11 // pred_check
          %p214 = pneg %p68
        $region14: #{tpu_custom_call.1} parent=11 // pred_check_branch
          %216 = sbr.rel (%p214) target = $region16
        $region15: #{tpu_custom_call.1} parent=11 // pred_region
          %s218 = ssub.s32 2048, 2048
          %219 = vsyncadd [#allocation6], %s218
          %s220 = sshll.u32 [#allocation5], 4
          %s221 = int_to_ptr.vmem [resolvable:$true] %s220
          %226 = dma.hbm_to_vmem [thread:$0]  %s1, 2048, %s221, [#allocation6], 128, 128, 8
        $region16: #{tpu_custom_call.1} parent=11 // pred_fallthru
          _
        // Predicated region
        $region17: #{tpu_custom_call.1} parent=11 // pred_check
          %p227 = pneg %p89
        $region18: #{tpu_custom_call.1} parent=11 // pred_check_branch
          %229 = sbr.rel (%p227) target = $region20
        $region19: #{tpu_custom_call.1} parent=11 // pred_region
          _
        $region20: #{tpu_custom_call.1} parent=11 // pred_fallthru
          _
        // Predicated region
        $region21: #{tpu_custom_call.1} parent=11 // pred_check
          %p230 = pneg %p110
        $region22: #{tpu_custom_call.1} parent=11 // pred_check_branch
          %232 = sbr.rel (%p230) target = $region24
        $region23: #{tpu_custom_call.1} parent=11 // pred_region
          %s234 = ssub.s32 4096, 4096
          %235 = vsyncadd [#allocation6], %s234
          %s236 = sshll.u32 [#allocation7], 4
          %s237 = int_to_ptr.vmem [resolvable:$true] %s236
          %242 = dma.hbm_to_vmem [thread:$0]  %s3, 4096, %s237, [#allocation6], 128, 128, 8
        $region24: #{tpu_custom_call.1} parent=11 // pred_fallthru
          _
        // Predicated region
        $region25: #{tpu_custom_call.1} parent=11 // pred_check
          %p243 = pneg %p131
        $region26: #{tpu_custom_call.1} parent=11 // pred_check_branch
          %245 = sbr.rel (%p243) target = $region28
        $region27: #{tpu_custom_call.1} parent=11 // pred_region
          _
        $region28: #{tpu_custom_call.1} parent=11 // pred_fallthru
          _
        // Predicated region
        $region29: #{tpu_custom_call.1} parent=11 // pred_check
          %p246 = pneg %p152
        $region30: #{tpu_custom_call.1} parent=11 // pred_check_branch
          %248 = sbr.rel (%p246) target = $region32
        $region31: #{tpu_custom_call.1} parent=11 // pred_region
          %s250 = ssub.s32 2048, 2048
          %251 = vsyncadd [#allocation9], %s250
          %s252 = sshll.u32 [#allocation8], 4
          %s253 = int_to_ptr.vmem [resolvable:$true] %s252
          %258 = dma.hbm_to_vmem [thread:$0]  %s5, 2048, %s253, [#allocation9], 128, 128, 8
        $region32: #{tpu_custom_call.1} parent=11 // pred_fallthru
          _
        // Predicated region
        $region33: #{tpu_custom_call.1} parent=11 // pred_check
          %p259 = pneg %p173
        $region34: #{tpu_custom_call.1} parent=11 // pred_check_branch
          %261 = sbr.rel (%p259) target = $region36
        $region35: #{tpu_custom_call.1} parent=11 // pred_region
          _
        $region36: #{tpu_custom_call.1} parent=11 // pred_fallthru
          _
      $region12: #{tpu_custom_call.1} parent=5 // pred_fallthru
        _
      %p262 = scmp.lt.s32.totalorder %s21, 2
      // Predicated region
      $region37: #{tpu_custom_call.1} parent=5 // pred_check
        %p263 = pneg %p262
      $region38: #{tpu_custom_call.1} parent=5 // pred_check_branch
        %265 = sbr.rel (%p263) target = $region40
      $region39: #{tpu_custom_call.1} parent=5 // pred_region
        // Predicated region
        $region41: #{tpu_custom_call.1} parent=39 // pred_check
          %p266 = pneg %p41
        $region42: #{tpu_custom_call.1} parent=39 // pred_check_branch
          %268 = sbr.rel (%p266) target = $region44
        $region43: #{tpu_custom_call.1} parent=39 // pred_region
          %s269 = sand.u32 %s31, 1
          %s270 = scalar_lea.sflag [#allocation3], %s269
          %s271 = sand.u32 %s31, 1
          %s272 = smul.addr %s271, 128
          %s273 = scalar_lea.vmem [#allocation2], %s272
          %s274 = smul.u32 16, %s21
          %s276 = ssub.s32 2048, 2048
          %277 = vsyncadd %s270, %s276
          %s278 = smul.addr %s274, 128
          %s279 = scalar_lea.hbm %s0, %s278
          %s280 = sshll.u32 %s273, 4
          %s281 = int_to_ptr.vmem [resolvable:$true] %s280
          %286 = dma.hbm_to_vmem [thread:$0]  %s279, 2048, %s281, %s270, 128, 128, 8
        $region44: #{tpu_custom_call.1} parent=39 // pred_fallthru
          _
      $region40: #{tpu_custom_call.1} parent=5 // pred_fallthru
        _
      %p287 = scmp.le.s32.totalorder 1, %s21
      %p288 = scmp.lt.s32.totalorder %s21, 3
      %p289 = pnand %p287, %p288
      %p290 = pneg %p289
      // Predicated region
      $region45: #{tpu_custom_call.1} parent=5 // pred_check
        _
      $region46: #{tpu_custom_call.1} parent=5 // pred_check_branch
        %292 = sbr.rel (%p289) target = $region48
      $region47: #{tpu_custom_call.1} parent=5 // pred_region
        %s293 = ssub.s32 %s21, 1
        %s294 = sand.u32 %s34, 1
        %s295 = scalar_lea.sflag [#allocation3], %s294
        %s296 = sand.u32 %s34, 1
        %s297 = smul.addr %s296, 128
        %s298 = scalar_lea.vmem [#allocation2], %s297
        // Predicated region
        $region49: #{tpu_custom_call.1} parent=47 // pred_check
          %p299 = pneg %p47
        $region50: #{tpu_custom_call.1} parent=47 // pred_check_branch
          %301 = sbr.rel (%p299) target = $region52
        $region51: #{tpu_custom_call.1} parent=47 // pred_region
          %302 = dma.done %s295, 2048
        $region52: #{tpu_custom_call.1} parent=47 // pred_fallthru
          _
        // Predicated region
        $region53: #{tpu_custom_call.1} parent=47 // pred_check
          %p303 = pneg %p68
        $region54: #{tpu_custom_call.1} parent=47 // pred_check_branch
          %305 = sbr.rel (%p303) target = $region56
        $region55: #{tpu_custom_call.1} parent=47 // pred_region
          %306 = dma.done [#allocation6], 2048
        $region56: #{tpu_custom_call.1} parent=47 // pred_fallthru
          _
        // Predicated region
        $region57: #{tpu_custom_call.1} parent=47 // pred_check
          %p307 = pneg %p110
        $region58: #{tpu_custom_call.1} parent=47 // pred_check_branch
          %309 = sbr.rel (%p307) target = $region60
        $region59: #{tpu_custom_call.1} parent=47 // pred_region
          %310 = dma.done [#allocation6], 4096
        $region60: #{tpu_custom_call.1} parent=47 // pred_fallthru
          _
        // Predicated region
        $region61: #{tpu_custom_call.1} parent=47 // pred_check
          %p311 = pneg %p152
        $region62: #{tpu_custom_call.1} parent=47 // pred_check_branch
          %313 = sbr.rel (%p311) target = $region64
        $region63: #{tpu_custom_call.1} parent=47 // pred_region
          %314 = dma.done [#allocation9], 2048
        $region64: #{tpu_custom_call.1} parent=47 // pred_fallthru
          _
        %s315 = sand.u32 %s34, 1
        %s316 = scalar_lea.sflag [#allocation3], %s315
        %s317 = sand.u32 %s34, 1
        %s318 = smul.addr %s317, 128
        %s319 = scalar_lea.vmem [#allocation2], %s318
        %p320 = pneg %p47
        %p321 = pneg %p44
        %p322 = pneg %p68
        %p323 = pneg %p65
        %p324 = pneg %p89
        %p325 = pneg %p86
        %p326 = pneg %p110
        %p327 = pneg %p107
        %p328 = pneg %p131
        %p329 = pneg %p128
        %p330 = pneg %p152
        %p331 = pneg %p149
        %p332 = pneg %p173
        %p333 = pneg %p170
        %p334 = pneg %p199
        %p335 = pneg %p196
        %s336 = sand.u32 %s186, 1
        %s337 = scalar_lea.sflag [#allocation4], %s336
        %s338 = sand.u32 %s186, 1
        %s339 = smul.addr %s338, 128
        %s340 = scalar_lea.vmem [#allocation10], %s339
        %s341 = smul.u32 16, %s26
        %s342 = smul.u32 16, %s26
        %v343 = vld [vmem:[%s298] sm:$0xff]
        %v344 = vld [vmem:[%s298 + $0x8] sm:$0xff]
        %v345 = vld [vmem:[%s298 + $0x10] sm:$0xff]
        %v346 = vld [vmem:[%s298 + $0x18] sm:$0xff]
        %v347 = vld [vmem:[%s298 + $0x20] sm:$0xff]
        %v348 = vld [vmem:[%s298 + $0x28] sm:$0xff]
        %v349 = vld [vmem:[%s298 + $0x30] sm:$0xff]
        %v350 = vld [vmem:[%s298 + $0x38] sm:$0xff]
        %v351 = vld [vmem:[%s298 + $0x40] sm:$0xff]
        %v352 = vld [vmem:[%s298 + $0x48] sm:$0xff]
        %v353 = vld [vmem:[%s298 + $0x50] sm:$0xff]
        %v354 = vld [vmem:[%s298 + $0x58] sm:$0xff]
        %v355 = vld [vmem:[%s298 + $0x60] sm:$0xff]
        %v356 = vld [vmem:[%s298 + $0x68] sm:$0xff]
        %v357 = vld [vmem:[%s298 + $0x70] sm:$0xff]
        %v358 = vld [vmem:[%s298 + $0x78] sm:$0xff]
        %v359 = vld [vmem:[#allocation5] sm:$0xff]
        %v360 = vld [vmem:[#allocation5 + $0x8] sm:$0xff]
        %v361 = vld [vmem:[#allocation5 + $0x10] sm:$0xff]
        %v362 = vld [vmem:[#allocation5 + $0x18] sm:$0xff]
        %v363 = vld [vmem:[#allocation5 + $0x20] sm:$0xff]
        %v364 = vld [vmem:[#allocation5 + $0x28] sm:$0xff]
        %v365 = vld [vmem:[#allocation5 + $0x30] sm:$0xff]
        %v366 = vld [vmem:[#allocation5 + $0x38] sm:$0xff]
        %v367 = vld [vmem:[#allocation5 + $0x40] sm:$0xff]
        %v368 = vld [vmem:[#allocation5 + $0x48] sm:$0xff]
        %v369 = vld [vmem:[#allocation5 + $0x50] sm:$0xff]
        %v370 = vld [vmem:[#allocation5 + $0x58] sm:$0xff]
        %v371 = vld [vmem:[#allocation5 + $0x60] sm:$0xff]
        %v372 = vld [vmem:[#allocation5 + $0x68] sm:$0xff]
        %v373 = vld [vmem:[#allocation5 + $0x70] sm:$0xff]
        %v374 = vld [vmem:[#allocation5 + $0x78] sm:$0xff]
        %v375 = vld [vmem:[%s2] sm:$0x1]
        %v377 = vlaneseq
        %v378 = vshrl.u32 %v377, 7
        %v379 = vsub.s32 0, %v378
        %v380 = vrot.slane %v375, %v379
        %382 = vmatprep.subr.mxu0 0.0
        %383 = vmatpush1.msra.mxu0 %v374
        %384 = vmatprep.subr.mxu0 0.0
        %385 = vmatpush1.msra.mxu0 %v373
        %386 = vmatprep.subr.mxu0 0.0
        %387 = vmatpush1.msra.mxu0 %v372
        %388 = vmatprep.subr.mxu0 0.0
        %389 = vmatpush1.msra.mxu0 %v371
        %390 = vmatprep.subr.mxu0 0.0
        %391 = vmatpush1.msra.mxu0 %v370
        %392 = vmatprep.subr.mxu0 0.0
        %393 = vmatpush1.msra.mxu0 %v369
        %394 = vmatprep.subr.mxu0 0.0
        %395 = vmatpush1.msra.mxu0 %v368
        %396 = vmatprep.subr.mxu0 0.0
        %397 = vmatpush1.msra.mxu0 %v367
        %398 = vmatprep.subr.mxu0 0.0
        %399 = vmatpush1.msra.mxu0 %v366
        %400 = vmatprep.subr.mxu0 0.0
        %401 = vmatpush1.msra.mxu0 %v365
        %402 = vmatprep.subr.mxu0 0.0
        %403 = vmatpush1.msra.mxu0 %v364
        %404 = vmatprep.subr.mxu0 0.0
        %405 = vmatpush1.msra.mxu0 %v363
        %406 = vmatprep.subr.mxu0 0.0
        %407 = vmatpush1.msra.mxu0 %v362
        %408 = vmatprep.subr.mxu0 0.0
        %409 = vmatpush1.msra.mxu0 %v361
        %410 = vmatprep.subr.mxu0 0.0
        %411 = vmatpush1.msra.mxu0 %v360
        %412 = vmatprep.subr.mxu0 0.0
        %413 = vmatpush1.msra.mxu0 %v359
        %414 = vmatprep.subr.mxu0 0.0
        %415 = vmatpush2.msra.mxu0 0.0
        %416 = vmatprep.subr.mxu0 0.0
        %417 = vmatpush2.msra.mxu0 0.0
        %418 = vmatprep.subr.mxu0 0.0
        %419 = vmatpush2.msra.mxu0 0.0
        %420 = vmatprep.subr.mxu0 0.0
        %421 = vmatpush2.msra.mxu0 0.0
        %422 = vmatprep.subr.mxu0 0.0
        %423 = vmatpush2.msra.mxu0 0.0
        %424 = vmatprep.subr.mxu0 0.0
        %425 = vmatpush2.msra.mxu0 0.0
        %426 = vmatprep.subr.mxu0 0.0
        %427 = vmatpush2.msra.mxu0 0.0
        %428 = vmatprep.subr.mxu0 0.0
        %429 = vmatpush2.msra.mxu0 0.0
        %430 = vmatprep.subr.mxu0 0.0
        %431 = vmatpush2.msra.mxu0 0.0
        %432 = vmatprep.subr.mxu0 0.0
        %433 = vmatpush2.msra.mxu0 0.0
        %434 = vmatprep.subr.mxu0 0.0
        %435 = vmatpush2.msra.mxu0 0.0
        %436 = vmatprep.subr.mxu0 0.0
        %437 = vmatpush2.msra.mxu0 0.0
        %438 = vmatprep.subr.mxu0 0.0
        %439 = vmatpush2.msra.mxu0 0.0
        %440 = vmatprep.subr.mxu0 0.0
        %441 = vmatpush2.msra.mxu0 0.0
        %442 = vmatprep.subr.mxu0 0.0
        %443 = vmatpush2.msra.mxu0 0.0
        %444 = vmatprep.subr.mxu0 0.0
        %445 = vmatpush2.msra.mxu0 0.0
        %446 = vmatprep.mubr.f32.mxu0 0.0
        %447 = vmatmul.mubr.f32.gmra.mxu0 %v343
        %v448 = vpop.f32.mrf.mxu0
        %v449 = vadd.f32 %v380, %v448
        %v450 = vpop.f32.mrf.mxu0
        %451 = vmatprep.mubr.f32.mxu0 0.0
        %452 = vmatmul.mubr.f32.gmra.mxu0 %v344
        %v453 = vpop.f32.mrf.mxu0
        %v454 = vadd.f32 %v380, %v453
        %v455 = vpop.f32.mrf.mxu0
        %456 = vmatprep.mubr.f32.mxu0 0.0
        %457 = vmatmul.mubr.f32.gmra.mxu0 %v345
        %v458 = vpop.f32.mrf.mxu0
        %v459 = vadd.f32 %v380, %v458
        %v460 = vpop.f32.mrf.mxu0
        %461 = vmatprep.mubr.f32.mxu0 0.0
        %462 = vmatmul.mubr.f32.gmra.mxu0 %v346
        %v463 = vpop.f32.mrf.mxu0
        %v464 = vadd.f32 %v380, %v463
        %v465 = vpop.f32.mrf.mxu0
        %466 = vmatprep.mubr.f32.mxu0 0.0
        %467 = vmatmul.mubr.f32.gmra.mxu0 %v347
        %v468 = vpop.f32.mrf.mxu0
        %v469 = vadd.f32 %v380, %v468
        %v470 = vpop.f32.mrf.mxu0
        %471 = vmatprep.mubr.f32.mxu0 0.0
        %472 = vmatmul.mubr.f32.gmra.mxu0 %v348
        %v473 = vpop.f32.mrf.mxu0
        %v474 = vadd.f32 %v380, %v473
        %v475 = vpop.f32.mrf.mxu0
        %476 = vmatprep.mubr.f32.mxu0 0.0
        %477 = vmatmul.mubr.f32.gmra.mxu0 %v349
        %v478 = vpop.f32.mrf.mxu0
        %v479 = vadd.f32 %v380, %v478
        %v480 = vpop.f32.mrf.mxu0
        %481 = vmatprep.mubr.f32.mxu0 0.0
        %482 = vmatmul.mubr.f32.gmra.mxu0 %v350
        %v483 = vpop.f32.mrf.mxu0
        %v484 = vadd.f32 %v380, %v483
        %v485 = vpop.f32.mrf.mxu0
        %486 = vmatprep.mubr.f32.mxu0 0.0
        %487 = vmatmul.mubr.f32.gmra.mxu0 %v351
        %v488 = vpop.f32.mrf.mxu0
        %v489 = vadd.f32 %v380, %v488
        %v490 = vpop.f32.mrf.mxu0
        %491 = vmatprep.mubr.f32.mxu0 0.0
        %492 = vmatmul.mubr.f32.gmra.mxu0 %v352
        %v493 = vpop.f32.mrf.mxu0
        %v494 = vadd.f32 %v380, %v493
        %v495 = vpop.f32.mrf.mxu0
        %496 = vmatprep.mubr.f32.mxu0 0.0
        %497 = vmatmul.mubr.f32.gmra.mxu0 %v353
        %v498 = vpop.f32.mrf.mxu0
        %v499 = vadd.f32 %v380, %v498
        %v500 = vpop.f32.mrf.mxu0
        %501 = vmatprep.mubr.f32.mxu0 0.0
        %502 = vmatmul.mubr.f32.gmra.mxu0 %v354
        %v503 = vpop.f32.mrf.mxu0
        %v504 = vadd.f32 %v380, %v503
        %v505 = vpop.f32.mrf.mxu0
        %506 = vmatprep.mubr.f32.mxu0 0.0
        %507 = vmatmul.mubr.f32.gmra.mxu0 %v355
        %v508 = vpop.f32.mrf.mxu0
        %v509 = vadd.f32 %v380, %v508
        %v510 = vpop.f32.mrf.mxu0
        %511 = vmatprep.mubr.f32.mxu0 0.0
        %512 = vmatmul.mubr.f32.gmra.mxu0 %v356
        %v513 = vpop.f32.mrf.mxu0
        %v514 = vadd.f32 %v380, %v513
        %v515 = vpop.f32.mrf.mxu0
        %516 = vmatprep.mubr.f32.mxu0 0.0
        %517 = vmatmul.mubr.f32.gmra.mxu0 %v357
        %v518 = vpop.f32.mrf.mxu0
        %v519 = vadd.f32 %v380, %v518
        %v520 = vpop.f32.mrf.mxu0
        %521 = vmatprep.mubr.f32.mxu0 0.0
        %522 = vmatmul.mubr.f32.gmra.mxu0 %v358
        %v523 = vpop.f32.mrf.mxu0
        %v524 = vadd.f32 %v380, %v523
        %v525 = vpop.f32.mrf.mxu0
        %526 = vdwg.mxu0
        %v527 = vmax.f32 %v449, 0.0
        %v528 = vmax.f32 %v454, 0.0
        %v529 = vmax.f32 %v459, 0.0
        %v530 = vmax.f32 %v464, 0.0
        %v531 = vmax.f32 %v469, 0.0
        %v532 = vmax.f32 %v474, 0.0
        %v533 = vmax.f32 %v479, 0.0
        %v534 = vmax.f32 %v484, 0.0
        %v535 = vmax.f32 %v489, 0.0
        %v536 = vmax.f32 %v494, 0.0
        %v537 = vmax.f32 %v499, 0.0
        %v538 = vmax.f32 %v504, 0.0
        %v539 = vmax.f32 %v509, 0.0
        %v540 = vmax.f32 %v514, 0.0
        %v541 = vmax.f32 %v519, 0.0
        %v542 = vmax.f32 %v524, 0.0
        %v543 = vld [vmem:[#allocation7] sm:$0xff]
        %v544 = vld [vmem:[#allocation7 + $0x8] sm:$0xff]
        %v545 = vld [vmem:[#allocation7 + $0x10] sm:$0xff]
        %v546 = vld [vmem:[#allocation7 + $0x18] sm:$0xff]
        %v547 = vld [vmem:[#allocation7 + $0x20] sm:$0xff]
        %v548 = vld [vmem:[#allocation7 + $0x28] sm:$0xff]
        %v549 = vld [vmem:[#allocation7 + $0x30] sm:$0xff]
        %v550 = vld [vmem:[#allocation7 + $0x38] sm:$0xff]
        %v551 = vld [vmem:[#allocation7 + $0x40] sm:$0xff]
        %v552 = vld [vmem:[#allocation7 + $0x48] sm:$0xff]
        %v553 = vld [vmem:[#allocation7 + $0x50] sm:$0xff]
        %v554 = vld [vmem:[#allocation7 + $0x58] sm:$0xff]
        %v555 = vld [vmem:[#allocation7 + $0x60] sm:$0xff]
        %v556 = vld [vmem:[#allocation7 + $0x68] sm:$0xff]
        %v557 = vld [vmem:[#allocation7 + $0x70] sm:$0xff]
        %v558 = vld [vmem:[#allocation7 + $0x78] sm:$0xff]
        %v559 = vld [vmem:[%s4] sm:$0x1]
        %v561 = vlaneseq
        %v562 = vshrl.u32 %v561, 7
        %v563 = vsub.s32 0, %v562
        %v564 = vrot.slane %v559, %v563
        %566 = vmatprep.subr.mxu0 0.0
        %567 = vmatpush1.msra.mxu0 %v558
        %568 = vmatprep.subr.mxu0 0.0
        %569 = vmatpush1.msra.mxu0 %v557
        %570 = vmatprep.subr.mxu0 0.0
        %571 = vmatpush1.msra.mxu0 %v556
        %572 = vmatprep.subr.mxu0 0.0
        %573 = vmatpush1.msra.mxu0 %v555
        %574 = vmatprep.subr.mxu0 0.0
        %575 = vmatpush1.msra.mxu0 %v554
        %576 = vmatprep.subr.mxu0 0.0
        %577 = vmatpush1.msra.mxu0 %v553
        %578 = vmatprep.subr.mxu0 0.0
        %579 = vmatpush1.msra.mxu0 %v552
        %580 = vmatprep.subr.mxu0 0.0
        %581 = vmatpush1.msra.mxu0 %v551
        %582 = vmatprep.subr.mxu0 0.0
        %583 = vmatpush1.msra.mxu0 %v550
        %584 = vmatprep.subr.mxu0 0.0
        %585 = vmatpush1.msra.mxu0 %v549
        %586 = vmatprep.subr.mxu0 0.0
        %587 = vmatpush1.msra.mxu0 %v548
        %588 = vmatprep.subr.mxu0 0.0
        %589 = vmatpush1.msra.mxu0 %v547
        %590 = vmatprep.subr.mxu0 0.0
        %591 = vmatpush1.msra.mxu0 %v546
        %592 = vmatprep.subr.mxu0 0.0
        %593 = vmatpush1.msra.mxu0 %v545
        %594 = vmatprep.subr.mxu0 0.0
        %595 = vmatpush1.msra.mxu0 %v544
        %596 = vmatprep.subr.mxu0 0.0
        %597 = vmatpush1.msra.mxu0 %v543
        %598 = vmatprep.subr.mxu0 0.0
        %599 = vmatpush2.msra.mxu0 0.0
        %600 = vmatprep.subr.mxu0 0.0
        %601 = vmatpush2.msra.mxu0 0.0
        %602 = vmatprep.subr.mxu0 0.0
        %603 = vmatpush2.msra.mxu0 0.0
        %604 = vmatprep.subr.mxu0 0.0
        %605 = vmatpush2.msra.mxu0 0.0
        %606 = vmatprep.subr.mxu0 0.0
        %607 = vmatpush2.msra.mxu0 0.0
        %608 = vmatprep.subr.mxu0 0.0
        %609 = vmatpush2.msra.mxu0 0.0
        %610 = vmatprep.subr.mxu0 0.0
        %611 = vmatpush2.msra.mxu0 0.0
        %612 = vmatprep.subr.mxu0 0.0
        %613 = vmatpush2.msra.mxu0 0.0
        %614 = vmatprep.subr.mxu0 0.0
        %615 = vmatpush2.msra.mxu0 0.0
        %616 = vmatprep.subr.mxu0 0.0
        %617 = vmatpush2.msra.mxu0 0.0
        %618 = vmatprep.subr.mxu0 0.0
        %619 = vmatpush2.msra.mxu0 0.0
        %620 = vmatprep.subr.mxu0 0.0
        %621 = vmatpush2.msra.mxu0 0.0
        %622 = vmatprep.subr.mxu0 0.0
        %623 = vmatpush2.msra.mxu0 0.0
        %624 = vmatprep.subr.mxu0 0.0
        %625 = vmatpush2.msra.mxu0 0.0
        %626 = vmatprep.subr.mxu0 0.0
        %627 = vmatpush2.msra.mxu0 0.0
        %628 = vmatprep.subr.mxu0 0.0
        %629 = vmatpush2.msra.mxu0 0.0
        %630 = vmatprep.mubr.f32.mxu0 0.0
        %631 = vmatmul.mubr.f32.gmra.mxu0 %v527
        %v632 = vpop.f32.mrf.mxu0
        %v633 = vadd.f32 %v564, %v632
        %v634 = vpop.f32.mrf.mxu0
        %635 = vmatprep.mubr.f32.mxu0 0.0
        %636 = vmatmul.mubr.f32.gmra.mxu0 %v528
        %v637 = vpop.f32.mrf.mxu0
        %v638 = vadd.f32 %v564, %v637
        %v639 = vpop.f32.mrf.mxu0
        %640 = vmatprep.mubr.f32.mxu0 0.0
        %641 = vmatmul.mubr.f32.gmra.mxu0 %v529
        %v642 = vpop.f32.mrf.mxu0
        %v643 = vadd.f32 %v564, %v642
        %v644 = vpop.f32.mrf.mxu0
        %645 = vmatprep.mubr.f32.mxu0 0.0
        %646 = vmatmul.mubr.f32.gmra.mxu0 %v530
        %v647 = vpop.f32.mrf.mxu0
        %v648 = vadd.f32 %v564, %v647
        %v649 = vpop.f32.mrf.mxu0
        %650 = vmatprep.mubr.f32.mxu0 0.0
        %651 = vmatmul.mubr.f32.gmra.mxu0 %v531
        %v652 = vpop.f32.mrf.mxu0
        %v653 = vadd.f32 %v564, %v652
        %v654 = vpop.f32.mrf.mxu0
        %655 = vmatprep.mubr.f32.mxu0 0.0
        %656 = vmatmul.mubr.f32.gmra.mxu0 %v532
        %v657 = vpop.f32.mrf.mxu0
        %v658 = vadd.f32 %v564, %v657
        %v659 = vpop.f32.mrf.mxu0
        %660 = vmatprep.mubr.f32.mxu0 0.0
        %661 = vmatmul.mubr.f32.gmra.mxu0 %v533
        %v662 = vpop.f32.mrf.mxu0
        %v663 = vadd.f32 %v564, %v662
        %v664 = vpop.f32.mrf.mxu0
        %665 = vmatprep.mubr.f32.mxu0 0.0
        %666 = vmatmul.mubr.f32.gmra.mxu0 %v534
        %v667 = vpop.f32.mrf.mxu0
        %v668 = vadd.f32 %v564, %v667
        %v669 = vpop.f32.mrf.mxu0
        %670 = vmatprep.mubr.f32.mxu0 0.0
        %671 = vmatmul.mubr.f32.gmra.mxu0 %v535
        %v672 = vpop.f32.mrf.mxu0
        %v673 = vadd.f32 %v564, %v672
        %v674 = vpop.f32.mrf.mxu0
        %675 = vmatprep.mubr.f32.mxu0 0.0
        %676 = vmatmul.mubr.f32.gmra.mxu0 %v536
        %v677 = vpop.f32.mrf.mxu0
        %v678 = vadd.f32 %v564, %v677
        %v679 = vpop.f32.mrf.mxu0
        %680 = vmatprep.mubr.f32.mxu0 0.0
        %681 = vmatmul.mubr.f32.gmra.mxu0 %v537
        %v682 = vpop.f32.mrf.mxu0
        %v683 = vadd.f32 %v564, %v682
        %v684 = vpop.f32.mrf.mxu0
        %685 = vmatprep.mubr.f32.mxu0 0.0
        %686 = vmatmul.mubr.f32.gmra.mxu0 %v538
        %v687 = vpop.f32.mrf.mxu0
        %v688 = vadd.f32 %v564, %v687
        %v689 = vpop.f32.mrf.mxu0
        %690 = vmatprep.mubr.f32.mxu0 0.0
        %691 = vmatmul.mubr.f32.gmra.mxu0 %v539
        %v692 = vpop.f32.mrf.mxu0
        %v693 = vadd.f32 %v564, %v692
        %v694 = vpop.f32.mrf.mxu0
        %695 = vmatprep.mubr.f32.mxu0 0.0
        %696 = vmatmul.mubr.f32.gmra.mxu0 %v540
        %v697 = vpop.f32.mrf.mxu0
        %v698 = vadd.f32 %v564, %v697
        %v699 = vpop.f32.mrf.mxu0
        %700 = vmatprep.mubr.f32.mxu0 0.0
        %701 = vmatmul.mubr.f32.gmra.mxu0 %v541
        %v702 = vpop.f32.mrf.mxu0
        %v703 = vadd.f32 %v564, %v702
        %v704 = vpop.f32.mrf.mxu0
        %705 = vmatprep.mubr.f32.mxu0 0.0
        %706 = vmatmul.mubr.f32.gmra.mxu0 %v542
        %v707 = vpop.f32.mrf.mxu0
        %v708 = vadd.f32 %v564, %v707
        %v709 = vpop.f32.mrf.mxu0
        %710 = vdwg.mxu0
        %v711 = vmax.f32 %v633, 0.0
        %v712 = vmax.f32 %v638, 0.0
        %v713 = vmax.f32 %v643, 0.0
        %v714 = vmax.f32 %v648, 0.0
        %v715 = vmax.f32 %v653, 0.0
        %v716 = vmax.f32 %v658, 0.0
        %v717 = vmax.f32 %v663, 0.0
        %v718 = vmax.f32 %v668, 0.0
        %v719 = vmax.f32 %v673, 0.0
        %v720 = vmax.f32 %v678, 0.0
        %v721 = vmax.f32 %v683, 0.0
        %v722 = vmax.f32 %v688, 0.0
        %v723 = vmax.f32 %v693, 0.0
        %v724 = vmax.f32 %v698, 0.0
        %v725 = vmax.f32 %v703, 0.0
        %v726 = vmax.f32 %v708, 0.0
        %s727 = scalar_lea.vmem [#allocation7], 128
        %v728 = vld [vmem:[%s727] sm:$0xff]
        %v729 = vld [vmem:[%s727 + $0x8] sm:$0xff]
        %v730 = vld [vmem:[%s727 + $0x10] sm:$0xff]
        %v731 = vld [vmem:[%s727 + $0x18] sm:$0xff]
        %v732 = vld [vmem:[%s727 + $0x20] sm:$0xff]
        %v733 = vld [vmem:[%s727 + $0x28] sm:$0xff]
        %v734 = vld [vmem:[%s727 + $0x30] sm:$0xff]
        %v735 = vld [vmem:[%s727 + $0x38] sm:$0xff]
        %v736 = vld [vmem:[%s727 + $0x40] sm:$0xff]
        %v737 = vld [vmem:[%s727 + $0x48] sm:$0xff]
        %v738 = vld [vmem:[%s727 + $0x50] sm:$0xff]
        %v739 = vld [vmem:[%s727 + $0x58] sm:$0xff]
        %v740 = vld [vmem:[%s727 + $0x60] sm:$0xff]
        %v741 = vld [vmem:[%s727 + $0x68] sm:$0xff]
        %v742 = vld [vmem:[%s727 + $0x70] sm:$0xff]
        %v743 = vld [vmem:[%s727 + $0x78] sm:$0xff]
        %s744 = scalar_lea.vmem %s4, 1
        %v745 = vld [vmem:[%s744] sm:$0x1]
        %v747 = vlaneseq
        %v748 = vshrl.u32 %v747, 7
        %v749 = vsub.s32 0, %v748
        %v750 = vrot.slane %v745, %v749
        %752 = vmatprep.subr.mxu0 0.0
        %753 = vmatpush1.msra.mxu0 %v743
        %754 = vmatprep.subr.mxu0 0.0
        %755 = vmatpush1.msra.mxu0 %v742
        %756 = vmatprep.subr.mxu0 0.0
        %757 = vmatpush1.msra.mxu0 %v741
        %758 = vmatprep.subr.mxu0 0.0
        %759 = vmatpush1.msra.mxu0 %v740
        %760 = vmatprep.subr.mxu0 0.0
        %761 = vmatpush1.msra.mxu0 %v739
        %762 = vmatprep.subr.mxu0 0.0
        %763 = vmatpush1.msra.mxu0 %v738
        %764 = vmatprep.subr.mxu0 0.0
        %765 = vmatpush1.msra.mxu0 %v737
        %766 = vmatprep.subr.mxu0 0.0
        %767 = vmatpush1.msra.mxu0 %v736
        %768 = vmatprep.subr.mxu0 0.0
        %769 = vmatpush1.msra.mxu0 %v735
        %770 = vmatprep.subr.mxu0 0.0
        %771 = vmatpush1.msra.mxu0 %v734
        %772 = vmatprep.subr.mxu0 0.0
        %773 = vmatpush1.msra.mxu0 %v733
        %774 = vmatprep.subr.mxu0 0.0
        %775 = vmatpush1.msra.mxu0 %v732
        %776 = vmatprep.subr.mxu0 0.0
        %777 = vmatpush1.msra.mxu0 %v731
        %778 = vmatprep.subr.mxu0 0.0
        %779 = vmatpush1.msra.mxu0 %v730
        %780 = vmatprep.subr.mxu0 0.0
        %781 = vmatpush1.msra.mxu0 %v729
        %782 = vmatprep.subr.mxu0 0.0
        %783 = vmatpush1.msra.mxu0 %v728
        %784 = vmatprep.subr.mxu0 0.0
        %785 = vmatpush2.msra.mxu0 0.0
        %786 = vmatprep.subr.mxu0 0.0
        %787 = vmatpush2.msra.mxu0 0.0
        %788 = vmatprep.subr.mxu0 0.0
        %789 = vmatpush2.msra.mxu0 0.0
        %790 = vmatprep.subr.mxu0 0.0
        %791 = vmatpush2.msra.mxu0 0.0
        %792 = vmatprep.subr.mxu0 0.0
        %793 = vmatpush2.msra.mxu0 0.0
        %794 = vmatprep.subr.mxu0 0.0
        %795 = vmatpush2.msra.mxu0 0.0
        %796 = vmatprep.subr.mxu0 0.0
        %797 = vmatpush2.msra.mxu0 0.0
        %798 = vmatprep.subr.mxu0 0.0
        %799 = vmatpush2.msra.mxu0 0.0
        %800 = vmatprep.subr.mxu0 0.0
        %801 = vmatpush2.msra.mxu0 0.0
        %802 = vmatprep.subr.mxu0 0.0
        %803 = vmatpush2.msra.mxu0 0.0
        %804 = vmatprep.subr.mxu0 0.0
        %805 = vmatpush2.msra.mxu0 0.0
        %806 = vmatprep.subr.mxu0 0.0
        %807 = vmatpush2.msra.mxu0 0.0
        %808 = vmatprep.subr.mxu0 0.0
        %809 = vmatpush2.msra.mxu0 0.0
        %810 = vmatprep.subr.mxu0 0.0
        %811 = vmatpush2.msra.mxu0 0.0
        %812 = vmatprep.subr.mxu0 0.0
        %813 = vmatpush2.msra.mxu0 0.0
        %814 = vmatprep.subr.mxu0 0.0
        %815 = vmatpush2.msra.mxu0 0.0
        %816 = vmatprep.mubr.f32.mxu0 0.0
        %817 = vmatmul.mubr.f32.gmra.mxu0 %v711
        %v818 = vpop.f32.mrf.mxu0
        %v819 = vadd.f32 %v750, %v818
        %v820 = vpop.f32.mrf.mxu0
        %821 = vmatprep.mubr.f32.mxu0 0.0
        %822 = vmatmul.mubr.f32.gmra.mxu0 %v712
        %v823 = vpop.f32.mrf.mxu0
        %v824 = vadd.f32 %v750, %v823
        %v825 = vpop.f32.mrf.mxu0
        %826 = vmatprep.mubr.f32.mxu0 0.0
        %827 = vmatmul.mubr.f32.gmra.mxu0 %v713
        %v828 = vpop.f32.mrf.mxu0
        %v829 = vadd.f32 %v750, %v828
        %v830 = vpop.f32.mrf.mxu0
        %831 = vmatprep.mubr.f32.mxu0 0.0
        %832 = vmatmul.mubr.f32.gmra.mxu0 %v714
        %v833 = vpop.f32.mrf.mxu0
        %v834 = vadd.f32 %v750, %v833
        %v835 = vpop.f32.mrf.mxu0
        %836 = vmatprep.mubr.f32.mxu0 0.0
        %837 = vmatmul.mubr.f32.gmra.mxu0 %v715
        %v838 = vpop.f32.mrf.mxu0
        %v839 = vadd.f32 %v750, %v838
        %v840 = vpop.f32.mrf.mxu0
        %841 = vmatprep.mubr.f32.mxu0 0.0
        %842 = vmatmul.mubr.f32.gmra.mxu0 %v716
        %v843 = vpop.f32.mrf.mxu0
        %v844 = vadd.f32 %v750, %v843
        %v845 = vpop.f32.mrf.mxu0
        %846 = vmatprep.mubr.f32.mxu0 0.0
        %847 = vmatmul.mubr.f32.gmra.mxu0 %v717
        %v848 = vpop.f32.mrf.mxu0
        %v849 = vadd.f32 %v750, %v848
        %v850 = vpop.f32.mrf.mxu0
        %851 = vmatprep.mubr.f32.mxu0 0.0
        %852 = vmatmul.mubr.f32.gmra.mxu0 %v718
        %v853 = vpop.f32.mrf.mxu0
        %v854 = vadd.f32 %v750, %v853
        %v855 = vpop.f32.mrf.mxu0
        %856 = vmatprep.mubr.f32.mxu0 0.0
        %857 = vmatmul.mubr.f32.gmra.mxu0 %v719
        %v858 = vpop.f32.mrf.mxu0
        %v859 = vadd.f32 %v750, %v858
        %v860 = vpop.f32.mrf.mxu0
        %861 = vmatprep.mubr.f32.mxu0 0.0
        %862 = vmatmul.mubr.f32.gmra.mxu0 %v720
        %v863 = vpop.f32.mrf.mxu0
        %v864 = vadd.f32 %v750, %v863
        %v865 = vpop.f32.mrf.mxu0
        %866 = vmatprep.mubr.f32.mxu0 0.0
        %867 = vmatmul.mubr.f32.gmra.mxu0 %v721
        %v868 = vpop.f32.mrf.mxu0
        %v869 = vadd.f32 %v750, %v868
        %v870 = vpop.f32.mrf.mxu0
        %871 = vmatprep.mubr.f32.mxu0 0.0
        %872 = vmatmul.mubr.f32.gmra.mxu0 %v722
        %v873 = vpop.f32.mrf.mxu0
        %v874 = vadd.f32 %v750, %v873
        %v875 = vpop.f32.mrf.mxu0
        %876 = vmatprep.mubr.f32.mxu0 0.0
        %877 = vmatmul.mubr.f32.gmra.mxu0 %v723
        %v878 = vpop.f32.mrf.mxu0
        %v879 = vadd.f32 %v750, %v878
        %v880 = vpop.f32.mrf.mxu0
        %881 = vmatprep.mubr.f32.mxu0 0.0
        %882 = vmatmul.mubr.f32.gmra.mxu0 %v724
        %v883 = vpop.f32.mrf.mxu0
        %v884 = vadd.f32 %v750, %v883
        %v885 = vpop.f32.mrf.mxu0
        %886 = vmatprep.mubr.f32.mxu0 0.0
        %887 = vmatmul.mubr.f32.gmra.mxu0 %v725
        %v888 = vpop.f32.mrf.mxu0
        %v889 = vadd.f32 %v750, %v888
        %v890 = vpop.f32.mrf.mxu0
        %891 = vmatprep.mubr.f32.mxu0 0.0
        %892 = vmatmul.mubr.f32.gmra.mxu0 %v726
        %v893 = vpop.f32.mrf.mxu0
        %v894 = vadd.f32 %v750, %v893
        %v895 = vpop.f32.mrf.mxu0
        %896 = vdwg.mxu0
        %v897 = vmax.f32 %v819, 0.0
        %v898 = vmax.f32 %v824, 0.0
        %v899 = vmax.f32 %v829, 0.0
        %v900 = vmax.f32 %v834, 0.0
        %v901 = vmax.f32 %v839, 0.0
        %v902 = vmax.f32 %v844, 0.0
        %v903 = vmax.f32 %v849, 0.0
        %v904 = vmax.f32 %v854, 0.0
        %v905 = vmax.f32 %v859, 0.0
        %v906 = vmax.f32 %v864, 0.0
        %v907 = vmax.f32 %v869, 0.0
        %v908 = vmax.f32 %v874, 0.0
        %v909 = vmax.f32 %v879, 0.0
        %v910 = vmax.f32 %v884, 0.0
        %v911 = vmax.f32 %v889, 0.0
        %v912 = vmax.f32 %v894, 0.0
        %v913 = vld [vmem:[#allocation8] sm:$0xff]
        %v914 = vld [vmem:[#allocation8 + $0x8] sm:$0xff]
        %v915 = vld [vmem:[#allocation8 + $0x10] sm:$0xff]
        %v916 = vld [vmem:[#allocation8 + $0x18] sm:$0xff]
        %v917 = vld [vmem:[#allocation8 + $0x20] sm:$0xff]
        %v918 = vld [vmem:[#allocation8 + $0x28] sm:$0xff]
        %v919 = vld [vmem:[#allocation8 + $0x30] sm:$0xff]
        %v920 = vld [vmem:[#allocation8 + $0x38] sm:$0xff]
        %v921 = vld [vmem:[#allocation8 + $0x40] sm:$0xff]
        %v922 = vld [vmem:[#allocation8 + $0x48] sm:$0xff]
        %v923 = vld [vmem:[#allocation8 + $0x50] sm:$0xff]
        %v924 = vld [vmem:[#allocation8 + $0x58] sm:$0xff]
        %v925 = vld [vmem:[#allocation8 + $0x60] sm:$0xff]
        %v926 = vld [vmem:[#allocation8 + $0x68] sm:$0xff]
        %v927 = vld [vmem:[#allocation8 + $0x70] sm:$0xff]
        %v928 = vld [vmem:[#allocation8 + $0x78] sm:$0xff]
        %v929 = vld [vmem:[%s6] sm:$0x1]
        %v931 = vlaneseq
        %v932 = vshrl.u32 %v931, 7
        %v933 = vsub.s32 0, %v932
        %v934 = vrot.slane %v929, %v933
        %936 = vmatprep.subr.mxu0 0.0
        %937 = vmatpush1.msra.mxu0 %v928
        %938 = vmatprep.subr.mxu0 0.0
        %939 = vmatpush1.msra.mxu0 %v927
        %940 = vmatprep.subr.mxu0 0.0
        %941 = vmatpush1.msra.mxu0 %v926
        %942 = vmatprep.subr.mxu0 0.0
        %943 = vmatpush1.msra.mxu0 %v925
        %944 = vmatprep.subr.mxu0 0.0
        %945 = vmatpush1.msra.mxu0 %v924
        %946 = vmatprep.subr.mxu0 0.0
        %947 = vmatpush1.msra.mxu0 %v923
        %948 = vmatprep.subr.mxu0 0.0
        %949 = vmatpush1.msra.mxu0 %v922
        %950 = vmatprep.subr.mxu0 0.0
        %951 = vmatpush1.msra.mxu0 %v921
        %952 = vmatprep.subr.mxu0 0.0
        %953 = vmatpush1.msra.mxu0 %v920
        %954 = vmatprep.subr.mxu0 0.0
        %955 = vmatpush1.msra.mxu0 %v919
        %956 = vmatprep.subr.mxu0 0.0
        %957 = vmatpush1.msra.mxu0 %v918
        %958 = vmatprep.subr.mxu0 0.0
        %959 = vmatpush1.msra.mxu0 %v917
        %960 = vmatprep.subr.mxu0 0.0
        %961 = vmatpush1.msra.mxu0 %v916
        %962 = vmatprep.subr.mxu0 0.0
        %963 = vmatpush1.msra.mxu0 %v915
        %964 = vmatprep.subr.mxu0 0.0
        %965 = vmatpush1.msra.mxu0 %v914
        %966 = vmatprep.subr.mxu0 0.0
        %967 = vmatpush1.msra.mxu0 %v913
        %968 = vmatprep.subr.mxu0 0.0
        %969 = vmatpush2.msra.mxu0 0.0
        %970 = vmatprep.subr.mxu0 0.0
        %971 = vmatpush2.msra.mxu0 0.0
        %972 = vmatprep.subr.mxu0 0.0
        %973 = vmatpush2.msra.mxu0 0.0
        %974 = vmatprep.subr.mxu0 0.0
        %975 = vmatpush2.msra.mxu0 0.0
        %976 = vmatprep.subr.mxu0 0.0
        %977 = vmatpush2.msra.mxu0 0.0
        %978 = vmatprep.subr.mxu0 0.0
        %979 = vmatpush2.msra.mxu0 0.0
        %980 = vmatprep.subr.mxu0 0.0
        %981 = vmatpush2.msra.mxu0 0.0
        %982 = vmatprep.subr.mxu0 0.0
        %983 = vmatpush2.msra.mxu0 0.0
        %984 = vmatprep.subr.mxu0 0.0
        %985 = vmatpush2.msra.mxu0 0.0
        %986 = vmatprep.subr.mxu0 0.0
        %987 = vmatpush2.msra.mxu0 0.0
        %988 = vmatprep.subr.mxu0 0.0
        %989 = vmatpush2.msra.mxu0 0.0
        %990 = vmatprep.subr.mxu0 0.0
        %991 = vmatpush2.msra.mxu0 0.0
        %992 = vmatprep.subr.mxu0 0.0
        %993 = vmatpush2.msra.mxu0 0.0
        %994 = vmatprep.subr.mxu0 0.0
        %995 = vmatpush2.msra.mxu0 0.0
        %996 = vmatprep.subr.mxu0 0.0
        %997 = vmatpush2.msra.mxu0 0.0
        %998 = vmatprep.subr.mxu0 0.0
        %999 = vmatpush2.msra.mxu0 0.0
        %1000 = vmatprep.mubr.f32.mxu0 0.0
        %1001 = vmatmul.mubr.f32.gmra.mxu0 %v897
        %v1002 = vpop.f32.mrf.mxu0
        %v1003 = vadd.f32 %v934, %v1002
        %v1004 = vpop.f32.mrf.mxu0
        %1005 = vmatprep.mubr.f32.mxu0 0.0
        %1006 = vmatmul.mubr.f32.gmra.mxu0 %v898
        %v1007 = vpop.f32.mrf.mxu0
        %v1008 = vadd.f32 %v934, %v1007
        %v1009 = vpop.f32.mrf.mxu0
        %1010 = vmatprep.mubr.f32.mxu0 0.0
        %1011 = vmatmul.mubr.f32.gmra.mxu0 %v899
        %v1012 = vpop.f32.mrf.mxu0
        %v1013 = vadd.f32 %v934, %v1012
        %v1014 = vpop.f32.mrf.mxu0
        %1015 = vmatprep.mubr.f32.mxu0 0.0
        %1016 = vmatmul.mubr.f32.gmra.mxu0 %v900
        %v1017 = vpop.f32.mrf.mxu0
        %v1018 = vadd.f32 %v934, %v1017
        %v1019 = vpop.f32.mrf.mxu0
        %1020 = vmatprep.mubr.f32.mxu0 0.0
        %1021 = vmatmul.mubr.f32.gmra.mxu0 %v901
        %v1022 = vpop.f32.mrf.mxu0
        %v1023 = vadd.f32 %v934, %v1022
        %v1024 = vpop.f32.mrf.mxu0
        %1025 = vmatprep.mubr.f32.mxu0 0.0
        %1026 = vmatmul.mubr.f32.gmra.mxu0 %v902
        %v1027 = vpop.f32.mrf.mxu0
        %v1028 = vadd.f32 %v934, %v1027
        %v1029 = vpop.f32.mrf.mxu0
        %1030 = vmatprep.mubr.f32.mxu0 0.0
        %1031 = vmatmul.mubr.f32.gmra.mxu0 %v903
        %v1032 = vpop.f32.mrf.mxu0
        %v1033 = vadd.f32 %v934, %v1032
        %v1034 = vpop.f32.mrf.mxu0
        %1035 = vmatprep.mubr.f32.mxu0 0.0
        %1036 = vmatmul.mubr.f32.gmra.mxu0 %v904
        %v1037 = vpop.f32.mrf.mxu0
        %v1038 = vadd.f32 %v934, %v1037
        %v1039 = vpop.f32.mrf.mxu0
        %1040 = vmatprep.mubr.f32.mxu0 0.0
        %1041 = vmatmul.mubr.f32.gmra.mxu0 %v905
        %v1042 = vpop.f32.mrf.mxu0
        %v1043 = vadd.f32 %v934, %v1042
        %v1044 = vpop.f32.mrf.mxu0
        %1045 = vmatprep.mubr.f32.mxu0 0.0
        %1046 = vmatmul.mubr.f32.gmra.mxu0 %v906
        %v1047 = vpop.f32.mrf.mxu0
        %v1048 = vadd.f32 %v934, %v1047
        %v1049 = vpop.f32.mrf.mxu0
        %1050 = vmatprep.mubr.f32.mxu0 0.0
        %1051 = vmatmul.mubr.f32.gmra.mxu0 %v907
        %v1052 = vpop.f32.mrf.mxu0
        %v1053 = vadd.f32 %v934, %v1052
        %v1054 = vpop.f32.mrf.mxu0
        %1055 = vmatprep.mubr.f32.mxu0 0.0
        %1056 = vmatmul.mubr.f32.gmra.mxu0 %v908
        %v1057 = vpop.f32.mrf.mxu0
        %v1058 = vadd.f32 %v934, %v1057
        %v1059 = vpop.f32.mrf.mxu0
        %1060 = vmatprep.mubr.f32.mxu0 0.0
        %1061 = vmatmul.mubr.f32.gmra.mxu0 %v909
        %v1062 = vpop.f32.mrf.mxu0
        %v1063 = vadd.f32 %v934, %v1062
        %v1064 = vpop.f32.mrf.mxu0
        %1065 = vmatprep.mubr.f32.mxu0 0.0
        %1066 = vmatmul.mubr.f32.gmra.mxu0 %v910
        %v1067 = vpop.f32.mrf.mxu0
        %v1068 = vadd.f32 %v934, %v1067
        %v1069 = vpop.f32.mrf.mxu0
        %1070 = vmatprep.mubr.f32.mxu0 0.0
        %1071 = vmatmul.mubr.f32.gmra.mxu0 %v911
        %v1072 = vpop.f32.mrf.mxu0
        %v1073 = vadd.f32 %v934, %v1072
        %v1074 = vpop.f32.mrf.mxu0
        %1075 = vmatprep.mubr.f32.mxu0 0.0
        %1076 = vmatmul.mubr.f32.gmra.mxu0 %v912
        %v1077 = vpop.f32.mrf.mxu0
        %v1078 = vadd.f32 %v934, %v1077
        %v1079 = vpop.f32.mrf.mxu0
        %1080 = vdwg.mxu0
        %v1081 = vlaneseq
        %v1082 = vand.u32 %v1081, 127
        %vm1083 = vcmp.lt.s32.totalorder %v1082, 2
        %v1084 = vsel %vm1083, %v1003, -3.4028235e+38
        %v1085 = vsel %vm1083, %v1008, -3.4028235e+38
        %v1086 = vsel %vm1083, %v1013, -3.4028235e+38
        %v1087 = vsel %vm1083, %v1018, -3.4028235e+38
        %v1088 = vsel %vm1083, %v1023, -3.4028235e+38
        %v1089 = vsel %vm1083, %v1028, -3.4028235e+38
        %v1090 = vsel %vm1083, %v1033, -3.4028235e+38
        %v1091 = vsel %vm1083, %v1038, -3.4028235e+38
        %v1092 = vsel %vm1083, %v1043, -3.4028235e+38
        %v1093 = vsel %vm1083, %v1048, -3.4028235e+38
        %v1094 = vsel %vm1083, %v1053, -3.4028235e+38
        %v1095 = vsel %vm1083, %v1058, -3.4028235e+38
        %v1096 = vsel %vm1083, %v1063, -3.4028235e+38
        %v1097 = vsel %vm1083, %v1068, -3.4028235e+38
        %v1098 = vsel %vm1083, %v1073, -3.4028235e+38
        %v1099 = vsel %vm1083, %v1078, -3.4028235e+38
        %1100 = vmax.xlane.f32.xlu0 %v1084
        %v1101 = vpop.xlane.xlu0 %1100
        %1102 = vmax.xlane.f32.xlu0 %v1085
        %v1103 = vpop.xlane.xlu0 %1102
        %1104 = vmax.xlane.f32.xlu0 %v1086
        %v1105 = vpop.xlane.xlu0 %1104
        %1106 = vmax.xlane.f32.xlu0 %v1087
        %v1107 = vpop.xlane.xlu0 %1106
        %1108 = vmax.xlane.f32.xlu0 %v1088
        %v1109 = vpop.xlane.xlu0 %1108
        %1110 = vmax.xlane.f32.xlu0 %v1089
        %v1111 = vpop.xlane.xlu0 %1110
        %1112 = vmax.xlane.f32.xlu0 %v1090
        %v1113 = vpop.xlane.xlu0 %1112
        %1114 = vmax.xlane.f32.xlu0 %v1091
        %v1115 = vpop.xlane.xlu0 %1114
        %1116 = vmax.xlane.f32.xlu0 %v1092
        %v1117 = vpop.xlane.xlu0 %1116
        %1118 = vmax.xlane.f32.xlu0 %v1093
        %v1119 = vpop.xlane.xlu0 %1118
        %1120 = vmax.xlane.f32.xlu0 %v1094
        %v1121 = vpop.xlane.xlu0 %1120
        %1122 = vmax.xlane.f32.xlu0 %v1095
        %v1123 = vpop.xlane.xlu0 %1122
        %1124 = vmax.xlane.f32.xlu0 %v1096
        %v1125 = vpop.xlane.xlu0 %1124
        %1126 = vmax.xlane.f32.xlu0 %v1097
        %v1127 = vpop.xlane.xlu0 %1126
        %1128 = vmax.xlane.f32.xlu0 %v1098
        %v1129 = vpop.xlane.xlu0 %1128
        %1130 = vmax.xlane.f32.xlu0 %v1099
        %v1131 = vpop.xlane.xlu0 %1130
        %v1132 = vsub.f32 %v1084, %v1101
        %v1133 = vsub.f32 %v1085, %v1103
        %v1134 = vsub.f32 %v1086, %v1105
        %v1135 = vsub.f32 %v1087, %v1107
        %v1136 = vsub.f32 %v1088, %v1109
        %v1137 = vsub.f32 %v1089, %v1111
        %v1138 = vsub.f32 %v1090, %v1113
        %v1139 = vsub.f32 %v1091, %v1115
        %v1140 = vsub.f32 %v1092, %v1117
        %v1141 = vsub.f32 %v1093, %v1119
        %v1142 = vsub.f32 %v1094, %v1121
        %v1143 = vsub.f32 %v1095, %v1123
        %v1144 = vsub.f32 %v1096, %v1125
        %v1145 = vsub.f32 %v1097, %v1127
        %v1146 = vsub.f32 %v1098, %v1129
        %v1147 = vsub.f32 %v1099, %v1131
        %v1148 = vmul.f32 %v1132, 1.442695
        %v1149 = vpow.pop %v1148
        %v1150 = vmul.f32 %v1133, 1.442695
        %v1151 = vpow.pop %v1150
        %v1152 = vmul.f32 %v1134, 1.442695
        %v1153 = vpow.pop %v1152
        %v1154 = vmul.f32 %v1135, 1.442695
        %v1155 = vpow.pop %v1154
        %v1156 = vmul.f32 %v1136, 1.442695
        %v1157 = vpow.pop %v1156
        %v1158 = vmul.f32 %v1137, 1.442695
        %v1159 = vpow.pop %v1158
        %v1160 = vmul.f32 %v1138, 1.442695
        %v1161 = vpow.pop %v1160
        %v1162 = vmul.f32 %v1139, 1.442695
        %v1163 = vpow.pop %v1162
        %v1164 = vmul.f32 %v1140, 1.442695
        %v1165 = vpow.pop %v1164
        %v1166 = vmul.f32 %v1141, 1.442695
        %v1167 = vpow.pop %v1166
        %v1168 = vmul.f32 %v1142, 1.442695
        %v1169 = vpow.pop %v1168
        %v1170 = vmul.f32 %v1143, 1.442695
        %v1171 = vpow.pop %v1170
        %v1172 = vmul.f32 %v1144, 1.442695
        %v1173 = vpow.pop %v1172
        %v1174 = vmul.f32 %v1145, 1.442695
        %v1175 = vpow.pop %v1174
        %v1176 = vmul.f32 %v1146, 1.442695
        %v1177 = vpow.pop %v1176
        %v1178 = vmul.f32 %v1147, 1.442695
        %v1179 = vpow.pop %v1178
        %1180 = vadd.xlane.f32.xlu0 %v1149
        %v1181 = vpop.xlane.xlu0 %1180
        %1182 = vadd.xlane.f32.xlu0 %v1151
        %v1183 = vpop.xlane.xlu0 %1182
        %1184 = vadd.xlane.f32.xlu0 %v1153
        %v1185 = vpop.xlane.xlu0 %1184
        %1186 = vadd.xlane.f32.xlu0 %v1155
        %v1187 = vpop.xlane.xlu0 %1186
        %1188 = vadd.xlane.f32.xlu0 %v1157
        %v1189 = vpop.xlane.xlu0 %1188
        %1190 = vadd.xlane.f32.xlu0 %v1159
        %v1191 = vpop.xlane.xlu0 %1190
        %1192 = vadd.xlane.f32.xlu0 %v1161
        %v1193 = vpop.xlane.xlu0 %1192
        %1194 = vadd.xlane.f32.xlu0 %v1163
        %v1195 = vpop.xlane.xlu0 %1194
        %1196 = vadd.xlane.f32.xlu0 %v1165
        %v1197 = vpop.xlane.xlu0 %1196
        %1198 = vadd.xlane.f32.xlu0 %v1167
        %v1199 = vpop.xlane.xlu0 %1198
        %1200 = vadd.xlane.f32.xlu0 %v1169
        %v1201 = vpop.xlane.xlu0 %1200
        %1202 = vadd.xlane.f32.xlu0 %v1171
        %v1203 = vpop.xlane.xlu0 %1202
        %1204 = vadd.xlane.f32.xlu0 %v1173
        %v1205 = vpop.xlane.xlu0 %1204
        %1206 = vadd.xlane.f32.xlu0 %v1175
        %v1207 = vpop.xlane.xlu0 %1206
        %1208 = vadd.xlane.f32.xlu0 %v1177
        %v1209 = vpop.xlane.xlu0 %1208
        %1210 = vadd.xlane.f32.xlu0 %v1179
        %v1211 = vpop.xlane.xlu0 %1210
        %v1212 = vrcp.pop %v1181
        %v1213 = vmul.f32 %v1149, %v1212
        %v1214 = vrcp.pop %v1183
        %v1215 = vmul.f32 %v1151, %v1214
        %v1216 = vrcp.pop %v1185
        %v1217 = vmul.f32 %v1153, %v1216
        %v1218 = vrcp.pop %v1187
        %v1219 = vmul.f32 %v1155, %v1218
        %v1220 = vrcp.pop %v1189
        %v1221 = vmul.f32 %v1157, %v1220
        %v1222 = vrcp.pop %v1191
        %v1223 = vmul.f32 %v1159, %v1222
        %v1224 = vrcp.pop %v1193
        %v1225 = vmul.f32 %v1161, %v1224
        %v1226 = vrcp.pop %v1195
        %v1227 = vmul.f32 %v1163, %v1226
        %v1228 = vrcp.pop %v1197
        %v1229 = vmul.f32 %v1165, %v1228
        %v1230 = vrcp.pop %v1199
        %v1231 = vmul.f32 %v1167, %v1230
        %v1232 = vrcp.pop %v1201
        %v1233 = vmul.f32 %v1169, %v1232
        %v1234 = vrcp.pop %v1203
        %v1235 = vmul.f32 %v1171, %v1234
        %v1236 = vrcp.pop %v1205
        %v1237 = vmul.f32 %v1173, %v1236
        %v1238 = vrcp.pop %v1207
        %v1239 = vmul.f32 %v1175, %v1238
        %v1240 = vrcp.pop %v1209
        %v1241 = vmul.f32 %v1177, %v1240
        %v1242 = vrcp.pop %v1211
        %v1243 = vmul.f32 %v1179, %v1242
        %1244 = vst [vmem:[%s340] sm:$0xff] %v1213
        %1245 = vst [vmem:[%s340 + $0x8] sm:$0xff] %v1215
        %1246 = vst [vmem:[%s340 + $0x10] sm:$0xff] %v1217
        %1247 = vst [vmem:[%s340 + $0x18] sm:$0xff] %v1219
        %1248 = vst [vmem:[%s340 + $0x20] sm:$0xff] %v1221
        %1249 = vst [vmem:[%s340 + $0x28] sm:$0xff] %v1223
        %1250 = vst [vmem:[%s340 + $0x30] sm:$0xff] %v1225
        %1251 = vst [vmem:[%s340 + $0x38] sm:$0xff] %v1227
        %1252 = vst [vmem:[%s340 + $0x40] sm:$0xff] %v1229
        %1253 = vst [vmem:[%s340 + $0x48] sm:$0xff] %v1231
        %1254 = vst [vmem:[%s340 + $0x50] sm:$0xff] %v1233
        %1255 = vst [vmem:[%s340 + $0x58] sm:$0xff] %v1235
        %1256 = vst [vmem:[%s340 + $0x60] sm:$0xff] %v1237
        %1257 = vst [vmem:[%s340 + $0x68] sm:$0xff] %v1239
        %1258 = vst [vmem:[%s340 + $0x70] sm:$0xff] %v1241
        %1259 = vst [vmem:[%s340 + $0x78] sm:$0xff] %v1243
        %s1260 = sand.u32 %s186, 1
        %s1261 = scalar_lea.sflag [#allocation4], %s1260
        %s1262 = sand.u32 %s186, 1
        %s1263 = smul.addr %s1262, 128
        %s1264 = scalar_lea.vmem [#allocation10], %s1263
        // Predicated region
        $region65: #{tpu_custom_call.1} parent=47 // pred_check
          %p1265 = pneg %p196
        $region66: #{tpu_custom_call.1} parent=47 // pred_check_branch
          %1267 = sbr.rel (%p1265) target = $region68
        $region67: #{tpu_custom_call.1} parent=47 // pred_region
          %s1268 = smul.u32 16, %s26
          %s1270 = ssub.s32 2048, 2048
          %1271 = vsyncadd %s1261, %s1270
          %s1272 = smul.addr %s1268, 128
          %s1273 = scalar_lea.hbm %s7, %s1272
          %s1274 = sshll.u32 %s1264, 4
          %s1275 = int_to_ptr.vmem [resolvable:$true] %s1274
          %1280 = dma.vmem_to_hbm [thread:$0]  %s1275, 2048, %s1273, %s1261, 128, 128, 8
        $region68: #{tpu_custom_call.1} parent=47 // pred_fallthru
          _
      $region48: #{tpu_custom_call.1} parent=5 // pred_fallthru
        _
      %p1281 = scmp.le.s32.totalorder 2, %s21
      // Predicated region
      $region69: #{tpu_custom_call.1} parent=5 // pred_check
        %p1282 = pneg %p1281
      $region70: #{tpu_custom_call.1} parent=5 // pred_check_branch
        %1284 = sbr.rel (%p1282) target = $region72
      $region71: #{tpu_custom_call.1} parent=5 // pred_region
        %s1285 = ssub.s32 %s21, 2
        // Predicated region
        $region73: #{tpu_custom_call.1} parent=71 // pred_check
          %p1286 = pneg %p202
        $region74: #{tpu_custom_call.1} parent=71 // pred_check_branch
          %1288 = sbr.rel (%p1286) target = $region76
        $region75: #{tpu_custom_call.1} parent=71 // pred_region
          %s1289 = sand.u32 %s187, 1
          %s1290 = scalar_lea.sflag [#allocation4], %s1289
          %s1291 = sand.u32 %s187, 1
          %s1292 = smul.addr %s1291, 128
          %s1293 = scalar_lea.vmem [#allocation10], %s1292
          %1294 = dma.done %s1290, 2048
        $region76: #{tpu_custom_call.1} parent=71 // pred_fallthru
          _
      $region72: #{tpu_custom_call.1} parent=5 // pred_fallthru
        _
    $region6: #{tpu_custom_call.1} parent=1 // loop_footer
      %s25 = sadd.s32 1, %s21
    $region7: #{tpu_custom_call.1} parent=1 // loop_footer_branch
      %20 = sbr.rel target = $region3
    $region8: #{tpu_custom_call.1} parent=1 // loop_exit
      _
    %1295 = vsyncpa [#allocation3], 1
    %s1296 = scalar_lea.sflag [#allocation3], 1
    %1297 = vsyncpa %s1296, 1
    %1298 = vsyncpa [#allocation6], 1
    %1299 = vsyncpa [#allocation9], 1
    %1300 = vsyncpa [#allocation4], 1
    %s1301 = scalar_lea.sflag [#allocation4], 1
    %1302 = vsyncpa %s1301, 1

</llo_original>
